<compile_context>
chip_gen: v7x
topology: tpu7x:2x2x1
jax: 0.10.0
libtpu: 0.0.40
codegen_flags: <defaults>
</compile_context>

<pallas_src>
import functools

import jax
import jax.numpy as jnp
from jax.experimental import pallas as pl
from jax.experimental.pallas import tpu as pltpu

NUM_BOND_TYPE = 4 + 1 + 1        # 6
NUM_BOND_DIRECTION = 3
NUM_ATOM_TYPE = 118 + 2 + 1      # 121
NUM_CHIRALITY_TAG = 4
BN_EPS = 1e-5
_ROW_ALIGN = 32                  # satisfies f32(8) / bf16(16) / int8(32) sublane tiling


def _round_up(x, m):
    return (x + m - 1) // m * m


def _vmem_budget_bytes():
    """Per-generation VMEM budget (~85% of capacity), conservative fallback."""
    try:
        cap = int(pltpu.get_tpu_info().vmem_capacity_bytes)
    except Exception:
        cap = 64 * 1024 * 1024   # v7x-sized fallback; safe on every generation
    return int(cap * 0.85)


def _default_tile_m():
    """Row tile per generation: 128 on v5e (128-wide MXU), 256 on v6e/v7x."""
    try:
        kind = jax.devices()[0].device_kind.lower()
    except Exception:
        kind = ""
    if "v5 lite" in kind or "v5e" in kind:
        return 128
    return 256


def _fused_gin_kernel(h0_hbm, a_ref, eagg_ref, w1_ref, b1_ref, w2_ref, b2_ref,
                      gamma_ref, beta_ref, out_hbm,
                      h_bf, o_work, sum_s, sumsq_s, dma_sem,
                      *, n_valid, n_padded, tile_m, a_resident):
    """grid = (num_layers, num_row_tiles); layer axis outer, row-tile axis inner.

    h_bf keeps node features resident in VMEM across layers; o_work is the
    single-buffered working buffer for the current layer's raw MLP output.
    h0 and the output live in HBM (memory_space=ANY) and are moved exactly
    once each by explicit DMAs.
    """
    l = pl.program_id(0)
    i = pl.program_id(1)
    n_layers = pl.num_programs(0)
    n_tiles = pl.num_programs(1)

    # One-shot DMA of the (host-pre-cast bf16) input node embeddings.
    @pl.when(jnp.logical_and(l == 0, i == 0))
    def _():
        cp = pltpu.make_async_copy(h0_hbm, h_bf, dma_sem)
        cp.start()
        cp.wait()

    # Reset BatchNorm accumulators at the start of every layer.
    @pl.when(i == 0)
    def _():
        sum_s[...] = jnp.zeros_like(sum_s)
        sumsq_s[...] = jnp.zeros_like(sumsq_s)

    row_start = pl.multiple_of(i * tile_m, tile_m)

    # ---- aggregation for this row tile:  A_tile @ h + edge_agg_tile ----
    if a_resident:
        # A (bf16, exact small multiplicities) is VMEM-resident for the whole
        # grid; slice the current row tile out of it.
        a_tile = a_ref[pl.ds(row_start, tile_m), :]
    else:
        # A streamed from HBM as int8 row tiles; cast to bf16 in-kernel so the
        # MXU matmul stays bf16 x bf16 with f32 accumulation.
        a_tile = a_ref[...]
    aggr = jnp.dot(a_tile.astype(jnp.bfloat16), h_bf[...],
                   preferred_element_type=jnp.float32)
    aggr = aggr + eagg_ref[0]

    # ---- GIN MLP:  Linear(D, 2D) -> ReLU -> Linear(2D, D) ----
    hid = jnp.dot(aggr.astype(jnp.bfloat16), w1_ref[0],
                  preferred_element_type=jnp.float32) + b1_ref[0]
    hid = jnp.maximum(hid, 0.0)
    o = jnp.dot(hid.astype(jnp.bfloat16), w2_ref[0],
                preferred_element_type=jnp.float32) + b2_ref[0]

    o_work[pl.ds(row_start, tile_m), :] = o

    # ---- BatchNorm statistics (batch stats, like torch BN in train()). Only
    # the last row tile can contain zero-padded rows -> confine masking to it.
    if n_valid == n_padded:
        sum_s[...] += jnp.sum(o, axis=0, keepdims=True)
        sumsq_s[...] += jnp.sum(o * o, axis=0, keepdims=True)
    else:
        @pl.when(i < n_tiles - 1)
        def _():
            sum_s[...] += jnp.sum(o, axis=0, keepdims=True)
            sumsq_s[...] += jnp.sum(o * o, axis=0, keepdims=True)

        @pl.when(i == n_tiles - 1)
        def _():
            row_ids = row_start + jax.lax.broadcasted_iota(
                jnp.int32, (tile_m, 1), 0)
            mask = (row_ids < n_valid).astype(jnp.float32)
            om = o * mask
            sum_s[...] += jnp.sum(om, axis=0, keepdims=True)
            sumsq_s[...] += jnp.sum(om * o, axis=0, keepdims=True)

    # ---- layer finalize (last row tile): BatchNorm over all nodes ----
    @pl.when(i == n_tiles - 1)
    def _():
        inv_n = 1.0 / float(n_valid)
        mean = sum_s[...] * inv_n
        var = sumsq_s[...] * inv_n - mean * mean          # biased batch variance
        scale = gamma_ref[0] * jax.lax.rsqrt(var + BN_EPS)
        shift = beta_ref[0] - mean * scale
        h_new = o_work[...] * scale + shift

        @pl.when(l < n_layers - 1)
        def _():
            # drop_ratio = 0 -> dropout is identity; intermediate layers ReLU.
            # NOTE: padded rows pick up the BN `shift` value, but A has all-zero
            # columns for padded nodes, so they never contaminate real rows.
            h_bf[...] = jnp.maximum(h_new, 0.0).astype(jnp.bfloat16)

        @pl.when(l == n_layers - 1)
        def _():
            # JK='last': the final layer's BN output (no ReLU) is the result.
            # Single explicit DMA: VMEM scratch -> HBM output.
            o_work[...] = h_new
            cp = pltpu.make_async_copy(o_work, out_hbm, dma_sem)
            cp.start()
            cp.wait()


def gin_forward_fused(params, x, edge_index, edge_attr, num_layer, emb_dim,
                      *, tile_m=None, force_stream_a=False, validate=False):
    """x: (N,2) int32; edge_index: (2,E) int32; edge_attr: (E,2) int32.
    Returns node representations (N, emb_dim) float32 (JK='last')."""
    if num_layer < 2:
        raise ValueError("Number of GNN layers must be greater than 1.")
    N = x.shape[0]
    D = emb_dim
    Dp = _round_up(D, 128)            # lane-dense feature dim
    Hp = _round_up(2 * D, 128)        # lane-dense hidden dim

    n_align = _round_up(N, _ROW_ALIGN)
    if tile_m is None:
        TM = min(_default_tile_m(), n_align)   # tiny graphs: one tile per layer
    else:
        TM = min(_round_up(tile_m, _ROW_ALIGN), n_align)
    NP = _round_up(N, TM)
    n_tiles = NP // TM

    # ---- plain-JAX glue: embeddings, self-loops, scatter-adds ----
    h0 = params["x_emb1"][x[:, 0]] + params["x_emb2"][x[:, 1]]          # (N, D)
    h0_bf = jnp.pad(h0, ((0, NP - N), (0, Dp - D))).astype(jnp.bfloat16)

    src = jnp.concatenate([edge_index[0], jnp.arange(N, dtype=jnp.int32)])
    dst = jnp.concatenate([edge_index[1], jnp.arange(N, dtype=jnp.int32)])
    self_loop_attr = jnp.concatenate(
        [jnp.full((N, 1), 4, jnp.int32), jnp.zeros((N, 1), jnp.int32)], axis=1)
    edge_attr_full = jnp.concatenate([edge_attr, self_loop_attr], axis=0)

    # Dense aggregation matrix counts[dst, src] += 1 (edge multiplicities).
    counts = jnp.zeros((NP, NP), jnp.int32).at[dst, src].add(1)

    # ---- VMEM-driven dispatch: cache A across layers when it fits ----
    budget = _vmem_budget_bytes()
    fixed = NP * Dp * 2 + NP * Dp * 4 + 4 * Dp * 4            # h_bf + o_work + BN acc
    stream = 2 * TM * Dp * 4                                   # eagg tile (dbl-buffered)
    stream += 2 * (Dp * Hp * 2 + Hp * Dp * 2 + (Hp + 3 * Dp) * 4)   # per-layer params
    a_resident_bytes = 2 * NP * NP * 2     # bf16; budget conservatively for 2 buffers
    a_stream_bytes = 2 * TM * NP * 1       # int8 row-tile stream
    a_resident = (not force_stream_a) and \
        (fixed + stream + a_resident_bytes <= int(budget * 0.8))
    if (not a_resident) and fixed + stream + a_stream_bytes > int(budget * 0.9):
        raise ValueError("graph too large for the dense-A kernel; lower tile_m "
                         "or implement the block-sparse aggregation TODO")

    if a_resident:
        # A read from HBM once -> bf16 storage (exact for multiplicity <= 256).
        A = counts.astype(jnp.bfloat16)
    else:
        # A re-streamed every layer (the HBM-bound term) -> int8 halves the
        # dominant stream; exact for multiplicity <= 127 (molecular graphs ~1).
        A = counts.astype(jnp.int8)
    if validate:  # host sync; do not use under jit
        max_mult = int(jnp.max(counts))
        limit = 256 if a_resident else 127
        assert max_mult <= limit, f"edge multiplicity {max_mult} overflows A dtype"

    eaggs, w1s, b1s, w2s, b2s, gammas, betas = [], [], [], [], [], [], []
    for lp in params["layers"]:
        ee = lp["e_emb1"][edge_attr_full[:, 0]] + lp["e_emb2"][edge_attr_full[:, 1]]
        eagg = jnp.zeros((NP, D), jnp.float32).at[dst].add(ee)
        eaggs.append(jnp.pad(eagg, ((0, 0), (0, Dp - D))))
        w1s.append(jnp.pad(lp["w1"], ((0, Dp - D), (0, Hp - 2 * D))))
        b1s.append(jnp.pad(lp["b1"], ((0, 0), (0, Hp - 2 * D))))
        w2s.append(jnp.pad(lp["w2"], ((0, Hp - 2 * D), (0, Dp - D))))
        b2s.append(jnp.pad(lp["b2"], ((0, 0), (0, Dp - D))))
        gammas.append(jnp.pad(lp["gamma"], ((0, 0), (0, Dp - D))))
        betas.append(jnp.pad(lp["beta"], ((0, 0), (0, Dp - D))))

    eagg_s = jnp.stack(eaggs)                              # (L, NP, Dp) f32
    w1_s = jnp.stack(w1s).astype(jnp.bfloat16)             # (L, Dp, Hp)
    b1_s = jnp.stack(b1s)                                  # (L, 1, Hp)  f32
    w2_s = jnp.stack(w2s).astype(jnp.bfloat16)             # (L, Hp, Dp)
    b2_s = jnp.stack(b2s)                                  # (L, 1, Dp)  f32
    gamma_s = jnp.stack(gammas)                            # (L, 1, Dp)  f32
    beta_s = jnp.stack(betas)                              # (L, 1, Dp)  f32

    if a_resident:
        a_spec = pl.BlockSpec((NP, NP), lambda l, i: (0, 0))   # DMA'd once, stays in VMEM
    else:
        a_spec = pl.BlockSpec((TM, NP), lambda l, i: (i, 0))   # row-tile stream per layer

    kernel = functools.partial(_fused_gin_kernel, n_valid=N, n_padded=NP,
                               tile_m=TM, a_resident=a_resident)

    out_p = pl.pallas_call(
        kernel,
        out_shape=jax.ShapeDtypeStruct((NP, Dp), jnp.float32),
        grid=(num_layer, n_tiles),
        in_specs=[
            pl.BlockSpec(memory_space=pl.ANY),                  # h0 (HBM, DMA'd once)
            a_spec,                                             # aggregation matrix
            pl.BlockSpec((1, TM, Dp), lambda l, i: (l, i, 0)),  # edge-agg tile
            pl.BlockSpec((1, Dp, Hp), lambda l, i: (l, 0, 0)),  # W1 (per layer)
            pl.BlockSpec((1, 1, Hp), lambda l, i: (l, 0, 0)),   # b1
            pl.BlockSpec((1, Hp, Dp), lambda l, i: (l, 0, 0)),  # W2
            pl.BlockSpec((1, 1, Dp), lambda l, i: (l, 0, 0)),   # b2
            pl.BlockSpec((1, 1, Dp), lambda l, i: (l, 0, 0)),   # gamma
            pl.BlockSpec((1, 1, Dp), lambda l, i: (l, 0, 0)),   # beta
        ],
        out_specs=pl.BlockSpec(memory_space=pl.ANY),            # written via explicit DMA
        scratch_shapes=[
            pltpu.VMEM((NP, Dp), jnp.bfloat16),   # resident node features
            pltpu.VMEM((NP, Dp), jnp.float32),    # per-layer working buffer
            pltpu.VMEM((1, Dp), jnp.float32),     # BN sum
            pltpu.VMEM((1, Dp), jnp.float32),     # BN sum of squares
            pltpu.SemaphoreType.DMA(()),          # h0 load / output store
        ],
        compiler_params=pltpu.CompilerParams(
            dimension_semantics=("arbitrary", "arbitrary"),
            vmem_limit_bytes=budget),
    )(h0_bf, A, eagg_s, w1_s, b1_s, w2_s, b2_s, gamma_s, beta_s)

    return out_p[:N, :D]


def build_params(key, num_layer, emb_dim):
    """Deterministic synthetic parameter init (shapes match the torch module)."""
    keys = jax.random.split(key, 4 + 6 * num_layer)
    it = iter(keys)
    p = {}
    s = 0.1
    p["x_emb1"] = jax.random.normal(next(it), (NUM_ATOM_TYPE, emb_dim), jnp.float32) * s
    p["x_emb2"] = jax.random.normal(next(it), (NUM_CHIRALITY_TAG, emb_dim), jnp.float32) * s
    p["layers"] = []
    for _ in range(num_layer):
        lp = {
            "e_emb1": jax.random.normal(next(it), (NUM_BOND_TYPE, emb_dim), jnp.float32) * s,
            "e_emb2": jax.random.normal(next(it), (NUM_BOND_DIRECTION, emb_dim), jnp.float32) * s,
            "w1": jax.random.normal(next(it), (emb_dim, 2 * emb_dim), jnp.float32) * s,
            "b1": jnp.zeros((1, 2 * emb_dim), jnp.float32),
            "w2": jax.random.normal(next(it), (2 * emb_dim, emb_dim), jnp.float32) * s,
            "b2": jnp.zeros((1, emb_dim), jnp.float32),
            "gamma": jnp.ones((1, emb_dim), jnp.float32),
            "beta": jnp.zeros((1, emb_dim), jnp.float32),
        }
        p["layers"].append(lp)
    return p


def ref_forward(params, x, edge_index, edge_attr, num_layer, emb_dim):
    """Pure-JAX reference (message-passing form), mirroring the kernel's bf16
    MXU inputs so the comparison is tight."""
    N = x.shape[0]
    f32 = jnp.float32

    def bf(t):   # emulate bf16 MXU operand rounding (accumulation stays f32)
        return t.astype(jnp.bfloat16).astype(f32)

    h = params["x_emb1"][x[:, 0]] + params["x_emb2"][x[:, 1]]
    src = jnp.concatenate([edge_index[0], jnp.arange(N, dtype=jnp.int32)])
    dst = jnp.concatenate([edge_index[1], jnp.arange(N, dtype=jnp.int32)])
    ea = jnp.concatenate(
        [edge_attr,
         jnp.concatenate([jnp.full((N, 1), 4, jnp.int32),
                          jnp.zeros((N, 1), jnp.int32)], axis=1)], axis=0)
    for layer in range(num_layer):
        lp = params["layers"][layer]
        ee = lp["e_emb1"][ea[:, 0]] + lp["e_emb2"][ea[:, 1]]
        msg = bf(h)[src] + ee
        aggr = jnp.zeros((N, emb_dim), f32).at[dst].add(msg)
        hid = jnp.maximum(bf(aggr) @ bf(lp["w1"]) + lp["b1"], 0.0)
        o = bf(hid) @ bf(lp["w2"]) + lp["b2"]
        mean = jnp.mean(o, axis=0, keepdims=True)
        var = jnp.mean(o * o, axis=0, keepdims=True) - mean * mean
        o = (o - mean) * jax.lax.rsqrt(var + BN_EPS) * lp["gamma"] + lp["beta"]
        if layer != num_layer - 1:
            o = jnp.maximum(o, 0.0)
        h = o
    return h


if __name__ == "__main__":
    num_layer = 3
    emb_dim = 32
    N = 44           # nodes (not a multiple of the row tile -> exercises BN masking)
    E = 96           # edges (before self-loops)
    tile_m = 16      # rounds up to 32 -> 2 row tiles: exercises multi-tile BatchNorm

    key = jax.random.PRNGKey(0)
    k_par, k_atom, k_chir, k_src, k_dst, k_bt, k_bd = jax.random.split(key, 7)

    params = build_params(k_par, num_layer, emb_dim)

    x = jnp.stack([
        jax.random.randint(k_atom, (N,), 0, NUM_ATOM_TYPE, dtype=jnp.int32),
        jax.random.randint(k_chir, (N,), 0, NUM_CHIRALITY_TAG, dtype=jnp.int32),
    ], axis=1)
    edge_index = jnp.stack([
        jax.random.randint(k_src, (E,), 0, N, dtype=jnp.int32),
        jax.random.randint(k_dst, (E,), 0, N, dtype=jnp.int32),
    ], axis=0)
    edge_attr = jnp.stack([
        jax.random.randint(k_bt, (E,), 0, 4, dtype=jnp.int32),   # 4 reserved for self-loop
        jax.random.randint(k_bd, (E,), 0, NUM_BOND_DIRECTION, dtype=jnp.int32),
    ], axis=1)

    ref = jax.block_until_ready(
        ref_forward(params, x, edge_index, edge_attr, num_layer, emb_dim))

    # 1) default dispatch: small graph -> A cached in VMEM across layers (bf16).
    out_res = jax.block_until_ready(
        gin_forward_fused(params, x, edge_index, edge_attr, num_layer, emb_dim,
                          tile_m=tile_m, validate=True))
    err_res = float(jnp.max(jnp.abs(out_res - ref)))
    assert err_res < 3e-3, f"resident-A mismatch vs reference: max abs err = {err_res}"

    # 2) forced streaming path: int8 A row tiles re-streamed per layer (the
    #    large-graph code path), verified on the same inputs.
    out_str = jax.block_until_ready(
        gin_forward_fused(params, x, edge_index, edge_attr, num_layer, emb_dim,
                          tile_m=tile_m, force_stream_a=True, validate=True))
    err_str = float(jnp.max(jnp.abs(out_str - ref)))
    assert err_str < 3e-3, f"streamed-A mismatch vs reference: max abs err = {err_str}"

    print("KERNEL_OK")
</pallas_src>

<mosaic_0001>
module attributes {stable_mosaic.version = 11 : i64} {
  func.func @_fused_gin_kernel(%arg0: i32, %arg1: i32, %arg2: memref<64x128xbf16, #tpu.memory_space<any>>, %arg3: memref<64x64xbf16, #tpu.memory_space<vmem>>, %arg4: memref<1x32x128xf32, #tpu.memory_space<vmem>>, %arg5: memref<1x128x128xbf16, #tpu.memory_space<vmem>>, %arg6: memref<1x1x128xf32, #tpu.memory_space<vmem>>, %arg7: memref<1x128x128xbf16, #tpu.memory_space<vmem>>, %arg8: memref<1x1x128xf32, #tpu.memory_space<vmem>>, %arg9: memref<1x1x128xf32, #tpu.memory_space<vmem>>, %arg10: memref<1x1x128xf32, #tpu.memory_space<vmem>>, %arg11: memref<64x128xf32, #tpu.memory_space<any>>, %arg12: memref<64x128xbf16, #tpu.memory_space<vmem>>, %arg13: memref<64x128xf32, #tpu.memory_space<vmem>>, %arg14: memref<1x128xf32, #tpu.memory_space<vmem>>, %arg15: memref<1x128xf32, #tpu.memory_space<vmem>>, %arg16: memref<!tpu.dma_semaphore, #tpu.memory_space<semaphore_mem>>) attributes {dimension_semantics = [#tpu.dimension_semantics<arbitrary>, #tpu.dimension_semantics<arbitrary>], iteration_bounds = array<i64: 3, 2>, scalar_prefetch = 0 : i64, scratch_operands = 5 : i64, tpu.core_type = #tpu.core_type<tc>, window_params = [{}, {pipeline_mode = #tpu.pipeline_mode<synchronous>, transform_indices = @transform_1, window_bounds = array<i64: 64, 64>}, {transform_indices = @transform_2, window_bounds = array<i64: 1, 32, 128>}, {transform_indices = @transform_3, window_bounds = array<i64: 1, 128, 128>}, {transform_indices = @transform_4, window_bounds = array<i64: 1, 1, 128>}, {transform_indices = @transform_5, window_bounds = array<i64: 1, 128, 128>}, {transform_indices = @transform_6, window_bounds = array<i64: 1, 1, 128>}, {transform_indices = @transform_7, window_bounds = array<i64: 1, 1, 128>}, {transform_indices = @transform_8, window_bounds = array<i64: 1, 1, 128>}, {}]} {
    %c0_i32 = arith.constant 0 : i32
    %0 = arith.cmpi eq, %arg0, %c0_i32 : i32
    %c0_i32_0 = arith.constant 0 : i32
    %1 = arith.cmpi eq, %arg1, %c0_i32_0 : i32
    %2 = arith.andi %0, %1 : i1
    %3 = arith.extui %2 : i1 to i32
    %c0_i32_1 = arith.constant 0 : i32
    %4 = arith.cmpi ne, %3, %c0_i32_1 : i32
    scf.if %4 {
      tpu.enqueue_dma source(%arg2 : memref<64x128xbf16, #tpu.memory_space<any>>) target(%arg12 : memref<64x128xbf16, #tpu.memory_space<vmem>>) target_semaphore(%arg16 : memref<!tpu.dma_semaphore, #tpu.memory_space<semaphore_mem>>)
      tpu.wait_dma2 semaphore(%arg16 : memref<!tpu.dma_semaphore, #tpu.memory_space<semaphore_mem>>) src(%arg2 : memref<64x128xbf16, #tpu.memory_space<any>>) dst(%arg12 : memref<64x128xbf16, #tpu.memory_space<vmem>>)
    } else {
    }
    %c0_i32_2 = arith.constant 0 : i32
    %5 = arith.cmpi eq, %arg1, %c0_i32_2 : i32
    %6 = arith.extui %5 : i1 to i32
    %c0_i32_3 = arith.constant 0 : i32
    %7 = arith.cmpi ne, %6, %c0_i32_3 : i32
    scf.if %7 {
      %cst_30 = arith.constant 0.000000e+00 : f32
      %46 = vector.broadcast %cst_30 : f32 to vector<1x128xf32>
      %c0_31 = arith.constant 0 : index
      %c0_32 = arith.constant 0 : index
      %47 = vector.load %arg14[%c0_31, %c0_32] : memref<1x128xf32, #tpu.memory_space<vmem>>, vector<1x128xf32>
      tpu.vector_store %arg14[%c0_31, %c0_32], %46 {strides = array<i32>} : memref<1x128xf32, #tpu.memory_space<vmem>>, vector<1x128xf32>,
      %cst_33 = arith.constant 0.000000e+00 : f32
      %48 = vector.broadcast %cst_33 : f32 to vector<1x128xf32>
      %c0_34 = arith.constant 0 : index
      %c0_35 = arith.constant 0 : index
      %49 = vector.load %arg15[%c0_34, %c0_35] : memref<1x128xf32, #tpu.memory_space<vmem>>, vector<1x128xf32>
      tpu.vector_store %arg15[%c0_34, %c0_35], %48 {strides = array<i32>} : memref<1x128xf32, #tpu.memory_space<vmem>>, vector<1x128xf32>,
    } else {
    }
    %c32_i32 = arith.constant 32 : i32
    %8 = arith.muli %arg1, %c32_i32 : i32
    %9 = tpu.assume_multiple %8, 32 : i32
    %10 = arith.index_cast %9 : i32 to index
    %c0 = arith.constant 0 : index
    %11 = vector.load %arg3[%10, %c0] : memref<64x64xbf16, #tpu.memory_space<vmem>>, vector<32x64xbf16>
    %c0_4 = arith.constant 0 : index
    %c0_5 = arith.constant 0 : index
    %12 = vector.load %arg12[%c0_4, %c0_5] : memref<64x128xbf16, #tpu.memory_space<vmem>>, vector<64x128xbf16>
    %cst = arith.constant dense<0.000000e+00> : vector<32x128xf32>
    %13 = tpu.matmul %11, %12, %cst {dimension_numbers = #tpu.dot_dimension_numbers<[1], [0], [0], [1], [0, 0, 1, 1], [], []>} : vector<32x64xbf16>, vector<64x128xbf16>, vector<32x128xf32> -> vector<32x128xf32>
    %c0_6 = arith.constant 0 : index
    %c0_7 = arith.constant 0 : index
    %c0_8 = arith.constant 0 : index
    %14 = vector.load %arg4[%c0_6, %c0_7, %c0_8] : memref<1x32x128xf32, #tpu.memory_space<vmem>>, vector<1x32x128xf32>
    %15 = vector.shape_cast %14 : vector<1x32x128xf32> to vector<32x128xf32>
    %16 = arith.addf %13, %15 : vector<32x128xf32>
    %17 = arith.truncf %16 : vector<32x128xf32> to vector<32x128xbf16>
    %c0_9 = arith.constant 0 : index
    %c0_10 = arith.constant 0 : index
    %c0_11 = arith.constant 0 : index
    %18 = vector.load %arg5[%c0_9, %c0_10, %c0_11] : memref<1x128x128xbf16, #tpu.memory_space<vmem>>, vector<1x128x128xbf16>
    %19 = vector.shape_cast %18 : vector<1x128x128xbf16> to vector<128x128xbf16>
    %cst_12 = arith.constant dense<0.000000e+00> : vector<32x128xf32>
    %20 = tpu.matmul %17, %19, %cst_12 {dimension_numbers = #tpu.dot_dimension_numbers<[1], [0], [0], [1], [0, 0, 1, 1], [], []>} : vector<32x128xbf16>, vector<128x128xbf16>, vector<32x128xf32> -> vector<32x128xf32>
    %c0_13 = arith.constant 0 : index
    %c0_14 = arith.constant 0 : index
    %c0_15 = arith.constant 0 : index
    %21 = vector.load %arg6[%c0_13, %c0_14, %c0_15] : memref<1x1x128xf32, #tpu.memory_space<vmem>>, vector<1x1x128xf32>
    %22 = vector.shape_cast %21 : vector<1x1x128xf32> to vector<1x128xf32>
    %23 = vector.broadcast %22 : vector<1x128xf32> to vector<32x128xf32>
    %24 = arith.addf %20, %23 : vector<32x128xf32>
    %cst_16 = arith.constant 0.000000e+00 : f32
    %25 = vector.broadcast %cst_16 : f32 to vector<32x128xf32>
    %26 = arith.maximumf %24, %25 : vector<32x128xf32>
    %27 = arith.truncf %26 : vector<32x128xf32> to vector<32x128xbf16>
    %c0_17 = arith.constant 0 : index
    %c0_18 = arith.constant 0 : index
    %c0_19 = arith.constant 0 : index
    %28 = vector.load %arg7[%c0_17, %c0_18, %c0_19] : memref<1x128x128xbf16, #tpu.memory_space<vmem>>, vector<1x128x128xbf16>
    %29 = vector.shape_cast %28 : vector<1x128x128xbf16> to vector<128x128xbf16>
    %cst_20 = arith.constant dense<0.000000e+00> : vector<32x128xf32>
    %30 = tpu.matmul %27, %29, %cst_20 {dimension_numbers = #tpu.dot_dimension_numbers<[1], [0], [0], [1], [0, 0, 1, 1], [], []>} : vector<32x128xbf16>, vector<128x128xbf16>, vector<32x128xf32> -> vector<32x128xf32>
    %c0_21 = arith.constant 0 : index
    %c0_22 = arith.constant 0 : index
    %c0_23 = arith.constant 0 : index
    %31 = vector.load %arg8[%c0_21, %c0_22, %c0_23] : memref<1x1x128xf32, #tpu.memory_space<vmem>>, vector<1x1x128xf32>
    %32 = vector.shape_cast %31 : vector<1x1x128xf32> to vector<1x128xf32>
    %33 = vector.broadcast %32 : vector<1x128xf32> to vector<32x128xf32>
    %34 = arith.addf %30, %33 : vector<32x128xf32>
    %35 = arith.index_cast %9 : i32 to index
    %c0_24 = arith.constant 0 : index
    %36 = vector.load %arg13[%35, %c0_24] : memref<64x128xf32, #tpu.memory_space<vmem>>, vector<32x128xf32>
    tpu.vector_store %arg13[%35, %c0_24], %34 {strides = array<i32>} : memref<64x128xf32, #tpu.memory_space<vmem>>, vector<32x128xf32>,
    %c1_i32 = arith.constant 1 : i32
    %37 = arith.cmpi slt, %arg1, %c1_i32 : i32
    %38 = arith.extui %37 : i1 to i32
    %c0_i32_25 = arith.constant 0 : i32
    %39 = arith.cmpi ne, %38, %c0_i32_25 : i32
    scf.if %39 {
      %c0_30 = arith.constant 0 : index
      %c0_31 = arith.constant 0 : index
      %46 = vector.load %arg14[%c0_30, %c0_31] : memref<1x128xf32, #tpu.memory_space<vmem>>, vector<1x128xf32>
      %cst_32 = arith.constant dense<0.000000e+00> : vector<128xf32>
      %47 = vector.multi_reduction <add>, %34, %cst_32 [0] : vector<32x128xf32> to vector<128xf32>
      %48 = vector.shape_cast %47 : vector<128xf32> to vector<1x128xf32>
      %49 = arith.addf %46, %48 : vector<1x128xf32>
      %c0_33 = arith.constant 0 : index
      %c0_34 = arith.constant 0 : index
      %50 = vector.load %arg14[%c0_33, %c0_34] : memref<1x128xf32, #tpu.memory_space<vmem>>, vector<1x128xf32>
      tpu.vector_store %arg14[%c0_33, %c0_34], %49 {strides = array<i32>} : memref<1x128xf32, #tpu.memory_space<vmem>>, vector<1x128xf32>,
      %c0_35 = arith.constant 0 : index
      %c0_36 = arith.constant 0 : index
      %51 = vector.load %arg15[%c0_35, %c0_36] : memref<1x128xf32, #tpu.memory_space<vmem>>, vector<1x128xf32>
      %52 = arith.mulf %34, %34 : vector<32x128xf32>
      %cst_37 = arith.constant dense<0.000000e+00> : vector<128xf32>
      %53 = vector.multi_reduction <add>, %52, %cst_37 [0] : vector<32x128xf32> to vector<128xf32>
      %54 = vector.shape_cast %53 : vector<128xf32> to vector<1x128xf32>
      %55 = arith.addf %51, %54 : vector<1x128xf32>
      %c0_38 = arith.constant 0 : index
      %c0_39 = arith.constant 0 : index
      %56 = vector.load %arg15[%c0_38, %c0_39] : memref<1x128xf32, #tpu.memory_space<vmem>>, vector<1x128xf32>
      tpu.vector_store %arg15[%c0_38, %c0_39], %55 {strides = array<i32>} : memref<1x128xf32, #tpu.memory_space<vmem>>, vector<1x128xf32>,
    } else {
    }
    %c1_i32_26 = arith.constant 1 : i32
    %40 = arith.cmpi eq, %arg1, %c1_i32_26 : i32
    %41 = arith.extui %40 : i1 to i32
    %c0_i32_27 = arith.constant 0 : i32
    %42 = arith.cmpi ne, %41, %c0_i32_27 : i32
    scf.if %42 {
      %46 = tpu.iota {dimensions = array<i32: 0>} : vector<32x1xi32>
      %47 = vector.broadcast %9 : i32 to vector<32x1xi32>
      %48 = arith.addi %47, %46 : vector<32x1xi32>
      %c44_i32 = arith.constant 44 : i32
      %49 = vector.broadcast %c44_i32 : i32 to vector<32x1xi32>
      %50 = arith.cmpi slt, %48, %49 : vector<32x1xi32>
      %51 = arith.extui %50 : vector<32x1xi1> to vector<32x1xi32>
      %52 = arith.sitofp %51 : vector<32x1xi32> to vector<32x1xf32>
      %53 = vector.broadcast %52 : vector<32x1xf32> to vector<32x128xf32>
      %54 = arith.mulf %34, %53 : vector<32x128xf32>
      %c0_30 = arith.constant 0 : index
      %c0_31 = arith.constant 0 : index
      %55 = vector.load %arg14[%c0_30, %c0_31] : memref<1x128xf32, #tpu.memory_space<vmem>>, vector<1x128xf32>
      %cst_32 = arith.constant dense<0.000000e+00> : vector<128xf32>
      %56 = vector.multi_reduction <add>, %54, %cst_32 [0] : vector<32x128xf32> to vector<128xf32>
      %57 = vector.shape_cast %56 : vector<128xf32> to vector<1x128xf32>
      %58 = arith.addf %55, %57 : vector<1x128xf32>
      %c0_33 = arith.constant 0 : index
      %c0_34 = arith.constant 0 : index
      %59 = vector.load %arg14[%c0_33, %c0_34] : memref<1x128xf32, #tpu.memory_space<vmem>>, vector<1x128xf32>
      tpu.vector_store %arg14[%c0_33, %c0_34], %58 {strides = array<i32>} : memref<1x128xf32, #tpu.memory_space<vmem>>, vector<1x128xf32>,
      %c0_35 = arith.constant 0 : index
      %c0_36 = arith.constant 0 : index
      %60 = vector.load %arg15[%c0_35, %c0_36] : memref<1x128xf32, #tpu.memory_space<vmem>>, vector<1x128xf32>
      %61 = arith.mulf %54, %34 : vector<32x128xf32>
      %cst_37 = arith.constant dense<0.000000e+00> : vector<128xf32>
      %62 = vector.multi_reduction <add>, %61, %cst_37 [0] : vector<32x128xf32> to vector<128xf32>
      %63 = vector.shape_cast %62 : vector<128xf32> to vector<1x128xf32>
      %64 = arith.addf %60, %63 : vector<1x128xf32>
      %c0_38 = arith.constant 0 : index
      %c0_39 = arith.constant 0 : index
      %65 = vector.load %arg15[%c0_38, %c0_39] : memref<1x128xf32, #tpu.memory_space<vmem>>, vector<1x128xf32>
      tpu.vector_store %arg15[%c0_38, %c0_39], %64 {strides = array<i32>} : memref<1x128xf32, #tpu.memory_space<vmem>>, vector<1x128xf32>,
    } else {
    }
    %c1_i32_28 = arith.constant 1 : i32
    %43 = arith.cmpi eq, %arg1, %c1_i32_28 : i32
    %44 = arith.extui %43 : i1 to i32
    %c0_i32_29 = arith.constant 0 : i32
    %45 = arith.cmpi ne, %44, %c0_i32_29 : i32
    scf.if %45 {
      %c0_30 = arith.constant 0 : index
      %c0_31 = arith.constant 0 : index
      %46 = vector.load %arg14[%c0_30, %c0_31] : memref<1x128xf32, #tpu.memory_space<vmem>>, vector<1x128xf32>
      %cst_32 = arith.constant 0.0227272734 : f32
      %47 = vector.broadcast %cst_32 : f32 to vector<1x128xf32>
      %48 = arith.mulf %46, %47 : vector<1x128xf32>
      %c0_33 = arith.constant 0 : index
      %c0_34 = arith.constant 0 : index
      %49 = vector.load %arg15[%c0_33, %c0_34] : memref<1x128xf32, #tpu.memory_space<vmem>>, vector<1x128xf32>
      %cst_35 = arith.constant 0.0227272734 : f32
      %50 = vector.broadcast %cst_35 : f32 to vector<1x128xf32>
      %51 = arith.mulf %49, %50 : vector<1x128xf32>
      %52 = arith.mulf %48, %48 : vector<1x128xf32>
      %53 = arith.subf %51, %52 : vector<1x128xf32>
      %c0_36 = arith.constant 0 : index
      %c0_37 = arith.constant 0 : index
      %c0_38 = arith.constant 0 : index
      %54 = vector.load %arg9[%c0_36, %c0_37, %c0_38] : memref<1x1x128xf32, #tpu.memory_space<vmem>>, vector<1x1x128xf32>
      %55 = vector.shape_cast %54 : vector<1x1x128xf32> to vector<1x128xf32>
      %cst_39 = arith.constant 9.99999974E-6 : f32
      %56 = vector.broadcast %cst_39 : f32 to vector<1x128xf32>
      %57 = arith.addf %53, %56 : vector<1x128xf32>
      %58 = math.rsqrt %57 : vector<1x128xf32>
      %59 = arith.mulf %55, %58 : vector<1x128xf32>
      %c0_40 = arith.constant 0 : index
      %c0_41 = arith.constant 0 : index
      %c0_42 = arith.constant 0 : index
      %60 = vector.load %arg10[%c0_40, %c0_41, %c0_42] : memref<1x1x128xf32, #tpu.memory_space<vmem>>, vector<1x1x128xf32>
      %61 = vector.shape_cast %60 : vector<1x1x128xf32> to vector<1x128xf32>
      %62 = arith.mulf %48, %59 : vector<1x128xf32>
      %63 = arith.subf %61, %62 : vector<1x128xf32>
      %c0_43 = arith.constant 0 : index
      %c0_44 = arith.constant 0 : index
      %64 = vector.load %arg13[%c0_43, %c0_44] : memref<64x128xf32, #tpu.memory_space<vmem>>, vector<64x128xf32>
      %65 = vector.broadcast %59 : vector<1x128xf32> to vector<64x128xf32>
      %66 = arith.mulf %64, %65 : vector<64x128xf32>
      %67 = vector.broadcast %63 : vector<1x128xf32> to vector<64x128xf32>
      %68 = arith.addf %66, %67 : vector<64x128xf32>
      %c2_i32 = arith.constant 2 : i32
      %69 = arith.cmpi slt, %arg0, %c2_i32 : i32
      %70 = arith.extui %69 : i1 to i32
      %c0_i32_45 = arith.constant 0 : i32
      %71 = arith.cmpi ne, %70, %c0_i32_45 : i32
      scf.if %71 {
        %cst_48 = arith.constant 0.000000e+00 : f32
        %75 = vector.broadcast %cst_48 : f32 to vector<64x128xf32>
        %76 = arith.maximumf %68, %75 : vector<64x128xf32>
        %77 = arith.truncf %76 : vector<64x128xf32> to vector<64x128xbf16>
        %c0_49 = arith.constant 0 : index
        %c0_50 = arith.constant 0 : index
        %78 = vector.load %arg12[%c0_49, %c0_50] : memref<64x128xbf16, #tpu.memory_space<vmem>>, vector<64x128xbf16>
        tpu.vector_store %arg12[%c0_49, %c0_50], %77 {strides = array<i32>} : memref<64x128xbf16, #tpu.memory_space<vmem>>, vector<64x128xbf16>,
      } else {
      }
      %c2_i32_46 = arith.constant 2 : i32
      %72 = arith.cmpi eq, %arg0, %c2_i32_46 : i32
      %73 = arith.extui %72 : i1 to i32
      %c0_i32_47 = arith.constant 0 : i32
      %74 = arith.cmpi ne, %73, %c0_i32_47 : i32
      scf.if %74 {
        %c0_48 = arith.constant 0 : index
        %c0_49 = arith.constant 0 : index
        %75 = vector.load %arg13[%c0_48, %c0_49] : memref<64x128xf32, #tpu.memory_space<vmem>>, vector<64x128xf32>
        tpu.vector_store %arg13[%c0_48, %c0_49], %68 {strides = array<i32>} : memref<64x128xf32, #tpu.memory_space<vmem>>, vector<64x128xf32>,
        tpu.enqueue_dma source(%arg13 : memref<64x128xf32, #tpu.memory_space<vmem>>) target(%arg11 : memref<64x128xf32, #tpu.memory_space<any>>) target_semaphore(%arg16 : memref<!tpu.dma_semaphore, #tpu.memory_space<semaphore_mem>>)
        tpu.wait_dma2 semaphore(%arg16 : memref<!tpu.dma_semaphore, #tpu.memory_space<semaphore_mem>>) src(%arg13 : memref<64x128xf32, #tpu.memory_space<vmem>>) dst(%arg11 : memref<64x128xf32, #tpu.memory_space<any>>)
      } else {
      }
    } else {
    }
    return
  }
  func.func @transform_1(%arg0: i32, %arg1: i32) -> (i32, i32) {
    %c0_i32 = arith.constant 0 : i32
    %c0_i32_0 = arith.constant 0 : i32
    %c0_i32_1 = arith.constant 0 : i32
    return %c0_i32, %c0_i32_0 : i32, i32
  }
  func.func @transform_2(%arg0: i32, %arg1: i32) -> (i32, i32, i32) {
    %c0_i32 = arith.constant 0 : i32
    %c0_i32_0 = arith.constant 0 : i32
    return %arg0, %arg1, %c0_i32 : i32, i32, i32
  }
  func.func @transform_3(%arg0: i32, %arg1: i32) -> (i32, i32, i32) {
    %c0_i32 = arith.constant 0 : i32
    %c0_i32_0 = arith.constant 0 : i32
    %c0_i32_1 = arith.constant 0 : i32
    return %arg0, %c0_i32, %c0_i32_0 : i32, i32, i32
  }
  func.func @transform_4(%arg0: i32, %arg1: i32) -> (i32, i32, i32) {
    %c0_i32 = arith.constant 0 : i32
    %c0_i32_0 = arith.constant 0 : i32
    %c0_i32_1 = arith.constant 0 : i32
    return %arg0, %c0_i32, %c0_i32_0 : i32, i32, i32
  }
  func.func @transform_5(%arg0: i32, %arg1: i32) -> (i32, i32, i32) {
    %c0_i32 = arith.constant 0 : i32
    %c0_i32_0 = arith.constant 0 : i32
    %c0_i32_1 = arith.constant 0 : i32
    return %arg0, %c0_i32, %c0_i32_0 : i32, i32, i32
  }
  func.func @transform_6(%arg0: i32, %arg1: i32) -> (i32, i32, i32) {
    %c0_i32 = arith.constant 0 : i32
    %c0_i32_0 = arith.constant 0 : i32
    %c0_i32_1 = arith.constant 0 : i32
    return %arg0, %c0_i32, %c0_i32_0 : i32, i32, i32
  }
  func.func @transform_7(%arg0: i32, %arg1: i32) -> (i32, i32, i32) {
    %c0_i32 = arith.constant 0 : i32
    %c0_i32_0 = arith.constant 0 : i32
    %c0_i32_1 = arith.constant 0 : i32
    return %arg0, %c0_i32, %c0_i32_0 : i32, i32, i32
  }
  func.func @transform_8(%arg0: i32, %arg1: i32) -> (i32, i32, i32) {
    %c0_i32 = arith.constant 0 : i32
    %c0_i32_0 = arith.constant 0 : i32
    %c0_i32_1 = arith.constant 0 : i32
    return %arg0, %c0_i32, %c0_i32_0 : i32, i32, i32
  }
}

</mosaic_0001>

<llo_original>
// kernel: tpu_custom_call.1
$region0: #{tpu_custom_call.1}
  #allocation0 [shape = 'u32[]', space=smem, size = 0x4, offset = 0x4, fixed_abs, tag = 'smem constant byte address 0x4 - core index']
  #allocation1 [shape = 'u32[144,128]{1,0:T(1,128)}', space=vmem, size = 0x12000, scoped, tag = 'internal scratch']
  #allocation2 [shape = 'bf16[64,128]{1,0:T(16,128)(2,1)}', space=vmem, size = 0x4000, scoped, tag = 'scratch operand']
  #allocation3 [shape = 'f32[64,128]{1,0:T(8,128)}', space=vmem, size = 0x8000, scoped, tag = 'scratch operand']
  #allocation4 [shape = 'f32[1,128]{1,0:T(1,128)}', space=vmem, size = 0x200, scoped, tag = 'scratch operand']
  #allocation5 [shape = 'f32[1,128]{1,0:T(1,128)}', space=vmem, size = 0x200, scoped, tag = 'scratch operand']
  #allocation6 [shape = 's32[1]{0}', space=sflag, size = 0x4, scoped, tag = 'scratch operand']
  #allocation14 [shape = 's32[]', space=sflag, size = 0x4, offset = 0, fixed_abs, tag = 'sflag constant byte address 0x0 - dummy sync flag']
  #allocation15 [shape = 's32[]', space=sflag, size = 0x4, offset = 0, fixed_abs, tag = 'sflag constant byte address 0x0 - dummy sync flag']
  #allocation16 [shape = 'u32[]', space=smem, size = 0x4, offset = 0x44, fixed_abs, tag = 'smem constant byte address 0x44 - assertion arg 0']
  #allocation17 [shape = 'u32[]', space=smem, size = 0x4, offset = 0x48, fixed_abs, tag = 'smem constant byte address 0x48 - assertion arg 1']
  #allocation18 [shape = 's32[]', space=sflag, size = 0x4, offset = 0, fixed_abs, tag = 'sflag constant byte address 0x0 - dummy sync flag']
  #allocation19 [shape = 's32[]', space=sflag, size = 0x4, offset = 0, fixed_abs, tag = 'sflag constant byte address 0x0 - dummy sync flag']
  %s0 = inlined_call_operand.hbm [shape: bf16[64,128], index: 0, kind: input, shape index: {}]
  %s1 = inlined_call_operand.hbm [shape: bf16[64,64], index: 1, kind: input, shape index: {}]
  %s2 = inlined_call_operand.hbm [shape: f32[3,64,128], index: 2, kind: input, shape index: {}]
  %s3 = inlined_call_operand.hbm [shape: bf16[3,128,128], index: 3, kind: input, shape index: {}]
  %s4 = inlined_call_operand.vmem [shape: f32[3,1,128], index: 4, kind: input, shape index: {}]
  %s5 = inlined_call_operand.hbm [shape: bf16[3,128,128], index: 5, kind: input, shape index: {}]
  %s6 = inlined_call_operand.vmem [shape: f32[3,1,128], index: 6, kind: input, shape index: {}]
  %s7 = inlined_call_operand.vmem [shape: f32[3,1,128], index: 7, kind: input, shape index: {}]
  %s8 = inlined_call_operand.vmem [shape: f32[3,1,128], index: 8, kind: input, shape index: {}]
  %s9 = inlined_call_operand.hbm [shape: f32[64,128], index: 9, kind: output, shape index: {}]
  %s10 = sld [smem:[#allocation0]]
  $region101: #{tpu_custom_call.1} parent=0
    _
  %s12 = ssub.s32 1, %s10
  %s13 = scalar_select 0, %s12, %s10
  $region1: #{tpu_custom_call.1} parent=0
    #allocation7 [shape = 'u8[16384]{0}', space=vmem, size = 0x4000, scoped, tag = 'input window, operand 1, single buffered']
    #allocation8 [shape = 's32[2]{0}', space=sflag, size = 0x8, scoped, tag = 'scoped memory for tpu_custom_call.1']
    #allocation9 [shape = 'u8[32768]{0}', space=vmem, size = 0x8000, scoped, tag = 'input window, operand 2']
    #allocation10 [shape = 's32[2]{0}', space=sflag, size = 0x8, scoped, tag = 'scoped memory for tpu_custom_call.1']
    #allocation11 [shape = 'u8[65536]{0}', space=vmem, size = 0x10000, scoped, tag = 'input window, operand 3']
    #allocation12 [shape = 'u8[65536]{0}', space=vmem, size = 0x10000, scoped, tag = 'input window, operand 5']
    #allocation13 [shape = 's32[2]{0}', space=sflag, size = 0x8, scoped, tag = 'scoped memory for tpu_custom_call.1']
    %14 = vsyncpa [#allocation8], 0
    %15 = vsyncpa [#allocation10], 0
    %s16 = scalar_lea.sflag [#allocation10], 1
    %17 = vsyncpa %s16, 0
    %18 = vsyncpa [#allocation13], 0
    %s19 = scalar_lea.sflag [#allocation13], 1
    %20 = vsyncpa %s19, 0
    loop: start=0, step=1, limit=7
    $region2: #{tpu_custom_call.1} parent=1 // loop_pre_header
      _
    $region3: #{tpu_custom_call.1} parent=1 // loop_header
      %s22 = sphi 0, %s26
      %p23 = scmp.ge.s32.totalorder %s22, 7
      %s28 = sphi 0, %s38
      %s29 = sphi 0, %s34
      %s30 = sphi 0, %s28
      %s31 = sphi 0, %s29
      %s39 = sphi 0, %s39
      %s41 = sphi 0, %s39
      %s49 = sphi 0, %s41
      %s57 = sphi 0, %s59
      %s60 = sphi 0, %s57
      %s70 = sphi 0, %s60
      %s76 = sphi 0, %s78
      %s79 = sphi 0, %s76
      %s89 = sphi 0, %s79
      %s95 = sphi 0, %s97
      %s98 = sphi 0, %s95
      %s108 = sphi 0, %s98
      %s114 = sphi 0, %s116
      %s117 = sphi 0, %s114
      %s127 = sphi 0, %s117
      %s133 = sphi 0, %s135
      %s136 = sphi 0, %s133
      %s146 = sphi 0, %s136
      %s152 = sphi 0, %s154
      %s155 = sphi 0, %s152
      %s165 = sphi 0, %s155
      %s171 = sphi 0, %s173
      %s174 = sphi 0, %s171
      %s184 = sphi 0, %s174
    $region4: #{tpu_custom_call.1} parent=1 // loop_header_branch
      %25 = sbr.rel (%p23) target = $region8
    $region5: #{tpu_custom_call.1} parent=1 // loop_body
      %s27 = ssub.s32 %s22, 1
      %s32 = sadd.s32 1, %s29
      %p33 = scmp.ge.s32.totalorder %s32, 2
      %s34 = scalar_select %p33, 0, %s32
      %s35 = sadd.s32 1, %s28
      %s36 = scalar_select %p33, %s35, %s28
      %p37 = scmp.ge.s32.totalorder %s36, 3
      %s38 = scalar_select %p37, 0, %s36
      %s40 = sadd.s32 %s39, 1
      %p42 = scmp.eq.s32.totalorder %s22, 5
      %p43 = scmp.ne.s32.totalorder %s39, %s41
      %p44 = scmp.eq.s32.totalorder %s22, 0
      %p45 = por %p43, %p44
      %p46 = scmp.ne.s32.totalorder %s39, %s41
      %p47 = scmp.eq.s32.totalorder %s27, 5
      %p48 = por %p46, %p47
      %p50 = scmp.ne.s32.totalorder %s41, %s49
      %p51 = scmp.eq.s32.totalorder %s27, 0
      %p52 = por %p50, %p51
      %s53 = ssub.s32 %s28, %s38
      %s54 = ssub.s32 %s29, %s34
      %s55 = sor.u32 %s53, %s54
      %p56 = scmp.eq.s32.totalorder %s55, 0
      %s58 = sadd.s32 %s57, 1
      %s59 = scalar_select %p56, %s57, %s58
      %p61 = pneg %p56
      %p62 = scmp.eq.s32.totalorder %s22, 5
      %p63 = por %p61, %p62
      %p64 = scmp.ne.s32.totalorder %s57, %s60
      %p65 = scmp.eq.s32.totalorder %s22, 0
      %p66 = por %p64, %p65
      %p67 = scmp.ne.s32.totalorder %s57, %s60
      %p68 = scmp.eq.s32.totalorder %s27, 5
      %p69 = por %p67, %p68
      %p71 = scmp.ne.s32.totalorder %s60, %s70
      %p72 = scmp.eq.s32.totalorder %s27, 0
      %p73 = por %p71, %p72
      %s74 = ssub.s32 %s28, %s38
      %p75 = scmp.eq.s32.totalorder %s74, 0
      %s77 = sadd.s32 %s76, 1
      %s78 = scalar_select %p75, %s76, %s77
      %p80 = pneg %p75
      %p81 = scmp.eq.s32.totalorder %s22, 5
      %p82 = por %p80, %p81
      %p83 = scmp.ne.s32.totalorder %s76, %s79
      %p84 = scmp.eq.s32.totalorder %s22, 0
      %p85 = por %p83, %p84
      %p86 = scmp.ne.s32.totalorder %s76, %s79
      %p87 = scmp.eq.s32.totalorder %s27, 5
      %p88 = por %p86, %p87
      %p90 = scmp.ne.s32.totalorder %s79, %s89
      %p91 = scmp.eq.s32.totalorder %s27, 0
      %p92 = por %p90, %p91
      %s93 = ssub.s32 %s28, %s38
      %p94 = scmp.eq.s32.totalorder %s93, 0
      %s96 = sadd.s32 %s95, 1
      %s97 = scalar_select %p94, %s95, %s96
      %p99 = pneg %p94
      %p100 = scmp.eq.s32.totalorder %s22, 5
      %p101 = por %p99, %p100
      %p102 = scmp.ne.s32.totalorder %s95, %s98
      %p103 = scmp.eq.s32.totalorder %s22, 0
      %p104 = por %p102, %p103
      %p105 = scmp.ne.s32.totalorder %s95, %s98
      %p106 = scmp.eq.s32.totalorder %s27, 5
      %p107 = por %p105, %p106
      %p109 = scmp.ne.s32.totalorder %s98, %s108
      %p110 = scmp.eq.s32.totalorder %s27, 0
      %p111 = por %p109, %p110
      %s112 = ssub.s32 %s28, %s38
      %p113 = scmp.eq.s32.totalorder %s112, 0
      %s115 = sadd.s32 %s114, 1
      %s116 = scalar_select %p113, %s114, %s115
      %p118 = pneg %p113
      %p119 = scmp.eq.s32.totalorder %s22, 5
      %p120 = por %p118, %p119
      %p121 = scmp.ne.s32.totalorder %s114, %s117
      %p122 = scmp.eq.s32.totalorder %s22, 0
      %p123 = por %p121, %p122
      %p124 = scmp.ne.s32.totalorder %s114, %s117
      %p125 = scmp.eq.s32.totalorder %s27, 5
      %p126 = por %p124, %p125
      %p128 = scmp.ne.s32.totalorder %s117, %s127
      %p129 = scmp.eq.s32.totalorder %s27, 0
      %p130 = por %p128, %p129
      %s131 = ssub.s32 %s28, %s38
      %p132 = scmp.eq.s32.totalorder %s131, 0
      %s134 = sadd.s32 %s133, 1
      %s135 = scalar_select %p132, %s133, %s134
      %p137 = pneg %p132
      %p138 = scmp.eq.s32.totalorder %s22, 5
      %p139 = por %p137, %p138
      %p140 = scmp.ne.s32.totalorder %s133, %s136
      %p141 = scmp.eq.s32.totalorder %s22, 0
      %p142 = por %p140, %p141
      %p143 = scmp.ne.s32.totalorder %s133, %s136
      %p144 = scmp.eq.s32.totalorder %s27, 5
      %p145 = por %p143, %p144
      %p147 = scmp.ne.s32.totalorder %s136, %s146
      %p148 = scmp.eq.s32.totalorder %s27, 0
      %p149 = por %p147, %p148
      %s150 = ssub.s32 %s28, %s38
      %p151 = scmp.eq.s32.totalorder %s150, 0
      %s153 = sadd.s32 %s152, 1
      %s154 = scalar_select %p151, %s152, %s153
      %p156 = pneg %p151
      %p157 = scmp.eq.s32.totalorder %s22, 5
      %p158 = por %p156, %p157
      %p159 = scmp.ne.s32.totalorder %s152, %s155
      %p160 = scmp.eq.s32.totalorder %s22, 0
      %p161 = por %p159, %p160
      %p162 = scmp.ne.s32.totalorder %s152, %s155
      %p163 = scmp.eq.s32.totalorder %s27, 5
      %p164 = por %p162, %p163
      %p166 = scmp.ne.s32.totalorder %s155, %s165
      %p167 = scmp.eq.s32.totalorder %s27, 0
      %p168 = por %p166, %p167
      %s169 = ssub.s32 %s28, %s38
      %p170 = scmp.eq.s32.totalorder %s169, 0
      %s172 = sadd.s32 %s171, 1
      %s173 = scalar_select %p170, %s171, %s172
      %p175 = pneg %p170
      %p176 = scmp.eq.s32.totalorder %s22, 5
      %p177 = por %p175, %p176
      %p178 = scmp.ne.s32.totalorder %s171, %s174
      %p179 = scmp.eq.s32.totalorder %s22, 0
      %p180 = por %p178, %p179
      %p181 = scmp.ne.s32.totalorder %s171, %s174
      %p182 = scmp.eq.s32.totalorder %s27, 5
      %p183 = por %p181, %p182
      %p185 = scmp.ne.s32.totalorder %s174, %s184
      %p186 = scmp.eq.s32.totalorder %s27, 0
      %p187 = por %p185, %p186
      %p188 = scmp.le.s32.totalorder 1, %s22
      // Predicated region
      $region9: #{tpu_custom_call.1} parent=5 // pred_check
        %p189 = pneg %p188
      $region10: #{tpu_custom_call.1} parent=5 // pred_check_branch
        %191 = sbr.rel (%p189) target = $region12
      $region11: #{tpu_custom_call.1} parent=5 // pred_region
        %s192 = ssub.s32 %s22, 1
        // Predicated region
        $region13: #{tpu_custom_call.1} parent=11 // pred_check
          %p193 = pneg %p52
        $region14: #{tpu_custom_call.1} parent=11 // pred_check_branch
          %195 = sbr.rel (%p193) target = $region16
        $region15: #{tpu_custom_call.1} parent=11 // pred_region
          %s197 = ssub.s32 512, 512
          %198 = vsyncadd [#allocation8], %s197
          %s199 = sshll.u32 [#allocation7], 4
          %s200 = int_to_ptr.vmem [resolvable:$true] %s199
          %205 = dma.hbm_to_vmem [thread:$0]  %s1, 512, %s200, [#allocation8], 64, 64, 4
        $region16: #{tpu_custom_call.1} parent=11 // pred_fallthru
          _
      $region12: #{tpu_custom_call.1} parent=5 // pred_fallthru
        _
      %p206 = scmp.lt.s32.totalorder %s22, 6
      // Predicated region
      $region17: #{tpu_custom_call.1} parent=5 // pred_check
        %p207 = pneg %p206
      $region18: #{tpu_custom_call.1} parent=5 // pred_check_branch
        %209 = sbr.rel (%p207) target = $region20
      $region19: #{tpu_custom_call.1} parent=5 // pred_region
        // Predicated region
        $region21: #{tpu_custom_call.1} parent=19 // pred_check
          %p210 = pneg %p66
        $region22: #{tpu_custom_call.1} parent=19 // pred_check_branch
          %212 = sbr.rel (%p210) target = $region24
        $region23: #{tpu_custom_call.1} parent=19 // pred_region
          %s213 = sand.u32 %s22, 1
          %s214 = scalar_lea.sflag [#allocation10], %s213
          %s215 = sand.u32 %s57, 1
          %s216 = smul.addr %s215, 32
          %s217 = scalar_lea.vmem [#allocation9], %s216
          %s218 = smul.u32 4, %s29
          %s220 = ssub.s32 512, 512
          %221 = vsyncadd %s214, %s220
          %s222 = smul.addr %s28, 8
          %s223 = sadd.s32 %s218, %s222
          %s224 = smul.addr %s223, 128
          %s225 = scalar_lea.hbm %s2, %s224
          %s226 = sshll.u32 %s217, 4
          %s227 = int_to_ptr.vmem [resolvable:$true] %s226
          %232 = dma.hbm_to_vmem [thread:$0]  %s225, 512, %s227, %s214, 128, 128, 8
        $region24: #{tpu_custom_call.1} parent=19 // pred_fallthru
          _
        // Predicated region
        $region25: #{tpu_custom_call.1} parent=19 // pred_check
          %p233 = pneg %p85
        $region26: #{tpu_custom_call.1} parent=19 // pred_check_branch
          %235 = sbr.rel (%p233) target = $region28
        $region27: #{tpu_custom_call.1} parent=19 // pred_region
          %s236 = sand.u32 %s22, 1
          %s237 = scalar_lea.sflag [#allocation10], %s236
          %s238 = sand.u32 %s76, 1
          %s239 = smul.addr %s238, 64
          %s240 = scalar_lea.vmem [#allocation11], %s239
          %s242 = ssub.s32 1024, 1024
          %243 = vsyncadd %s237, %s242
          %s244 = smul.addr %s28, 16
          %s245 = smul.addr %s244, 64
          %s246 = scalar_lea.hbm %s3, %s245
          %s247 = sshll.u32 %s240, 4
          %s248 = int_to_ptr.vmem [resolvable:$true] %s247
          %253 = dma.hbm_to_vmem [thread:$0]  %s246, 1024, %s248, %s237, 64, 64, 4
        $region28: #{tpu_custom_call.1} parent=19 // pred_fallthru
          _
        // Predicated region
        $region29: #{tpu_custom_call.1} parent=19 // pred_check
          %p254 = pneg %p104
        $region30: #{tpu_custom_call.1} parent=19 // pred_check_branch
          %256 = sbr.rel (%p254) target = $region32
        $region31: #{tpu_custom_call.1} parent=19 // pred_region
          %p257 = scmp.lt.s32.totalorder %s28, 2
          %s258 = scalar_select %p257, %s28, 2
          %s259 = scalar_lea.vmem %s4, %s258
        $region32: #{tpu_custom_call.1} parent=19 // pred_fallthru
          _
        // Predicated region
        $region33: #{tpu_custom_call.1} parent=19 // pred_check
          %p260 = pneg %p123
        $region34: #{tpu_custom_call.1} parent=19 // pred_check_branch
          %262 = sbr.rel (%p260) target = $region36
        $region35: #{tpu_custom_call.1} parent=19 // pred_region
          %s263 = sand.u32 %s114, 1
          %s264 = scalar_lea.sflag [#allocation13], %s263
          %s265 = sand.u32 %s114, 1
          %s266 = smul.addr %s265, 64
          %s267 = scalar_lea.vmem [#allocation12], %s266
          %s269 = ssub.s32 1024, 1024
          %270 = vsyncadd %s264, %s269
          %s271 = smul.addr %s28, 16
          %s272 = smul.addr %s271, 64
          %s273 = scalar_lea.hbm %s5, %s272
          %s274 = sshll.u32 %s267, 4
          %s275 = int_to_ptr.vmem [resolvable:$true] %s274
          %280 = dma.hbm_to_vmem [thread:$0]  %s273, 1024, %s275, %s264, 64, 64, 4
        $region36: #{tpu_custom_call.1} parent=19 // pred_fallthru
          _
        // Predicated region
        $region37: #{tpu_custom_call.1} parent=19 // pred_check
          %p281 = pneg %p142
        $region38: #{tpu_custom_call.1} parent=19 // pred_check_branch
          %283 = sbr.rel (%p281) target = $region40
        $region39: #{tpu_custom_call.1} parent=19 // pred_region
          %p284 = scmp.lt.s32.totalorder %s28, 2
          %s285 = scalar_select %p284, %s28, 2
          %s286 = scalar_lea.vmem %s6, %s285
        $region40: #{tpu_custom_call.1} parent=19 // pred_fallthru
          _
        // Predicated region
        $region41: #{tpu_custom_call.1} parent=19 // pred_check
          %p287 = pneg %p161
        $region42: #{tpu_custom_call.1} parent=19 // pred_check_branch
          %289 = sbr.rel (%p287) target = $region44
        $region43: #{tpu_custom_call.1} parent=19 // pred_region
          %p290 = scmp.lt.s32.totalorder %s28, 2
          %s291 = scalar_select %p290, %s28, 2
          %s292 = scalar_lea.vmem %s7, %s291
        $region44: #{tpu_custom_call.1} parent=19 // pred_fallthru
          _
        // Predicated region
        $region45: #{tpu_custom_call.1} parent=19 // pred_check
          %p293 = pneg %p180
        $region46: #{tpu_custom_call.1} parent=19 // pred_check_branch
          %295 = sbr.rel (%p293) target = $region48
        $region47: #{tpu_custom_call.1} parent=19 // pred_region
          %p296 = scmp.lt.s32.totalorder %s28, 2
          %s297 = scalar_select %p296, %s28, 2
          %s298 = scalar_lea.vmem %s8, %s297
        $region48: #{tpu_custom_call.1} parent=19 // pred_fallthru
          _
      $region20: #{tpu_custom_call.1} parent=5 // pred_fallthru
        _
      %p299 = scmp.le.s32.totalorder 1, %s22
      // Predicated region
      $region49: #{tpu_custom_call.1} parent=5 // pred_check
        %p300 = pneg %p299
      $region50: #{tpu_custom_call.1} parent=5 // pred_check_branch
        %302 = sbr.rel (%p300) target = $region52
      $region51: #{tpu_custom_call.1} parent=5 // pred_region
        %s303 = ssub.s32 %s22, 1
        // Predicated region
        $region53: #{tpu_custom_call.1} parent=51 // pred_check
          %p304 = pneg %p52
        $region54: #{tpu_custom_call.1} parent=51 // pred_check_branch
          %306 = sbr.rel (%p304) target = $region56
        $region55: #{tpu_custom_call.1} parent=51 // pred_region
          %307 = dma.done [#allocation8], 512
        $region56: #{tpu_custom_call.1} parent=51 // pred_fallthru
          _
        %s308 = sand.u32 %s27, 1
        %s309 = scalar_lea.sflag [#allocation10], %s308
        %s310 = sand.u32 %s60, 1
        %s311 = smul.addr %s310, 32
        %s312 = scalar_lea.vmem [#allocation9], %s311
        // Predicated region
        $region57: #{tpu_custom_call.1} parent=51 // pred_check
          %p313 = pneg %p73
        $region58: #{tpu_custom_call.1} parent=51 // pred_check_branch
          %315 = sbr.rel (%p313) target = $region60
        $region59: #{tpu_custom_call.1} parent=51 // pred_region
          %316 = dma.done %s309, 512
        $region60: #{tpu_custom_call.1} parent=51 // pred_fallthru
          _
        %s317 = sand.u32 %s27, 1
        %s318 = scalar_lea.sflag [#allocation10], %s317
        %s319 = sand.u32 %s79, 1
        %s320 = smul.addr %s319, 64
        %s321 = scalar_lea.vmem [#allocation11], %s320
        // Predicated region
        $region61: #{tpu_custom_call.1} parent=51 // pred_check
          %p322 = pneg %p92
        $region62: #{tpu_custom_call.1} parent=51 // pred_check_branch
          %324 = sbr.rel (%p322) target = $region64
        $region63: #{tpu_custom_call.1} parent=51 // pred_region
          %325 = dma.done %s318, 1024
        $region64: #{tpu_custom_call.1} parent=51 // pred_fallthru
          _
        %s326 = sand.u32 %s117, 1
        %s327 = scalar_lea.sflag [#allocation13], %s326
        %s328 = sand.u32 %s117, 1
        %s329 = smul.addr %s328, 64
        %s330 = scalar_lea.vmem [#allocation12], %s329
        // Predicated region
        $region65: #{tpu_custom_call.1} parent=51 // pred_check
          %p331 = pneg %p130
        $region66: #{tpu_custom_call.1} parent=51 // pred_check_branch
          %333 = sbr.rel (%p331) target = $region68
        $region67: #{tpu_custom_call.1} parent=51 // pred_region
          %334 = dma.done %s327, 1024
        $region68: #{tpu_custom_call.1} parent=51 // pred_fallthru
          _
        %p335 = pneg %p52
        %p336 = pneg %p48
        %s337 = sand.u32 %s27, 1
        %s338 = scalar_lea.sflag [#allocation10], %s337
        %s339 = sand.u32 %s60, 1
        %s340 = smul.addr %s339, 32
        %s341 = scalar_lea.vmem [#allocation9], %s340
        %p342 = pneg %p73
        %p343 = pneg %p69
        %s344 = sand.u32 %s27, 1
        %s345 = scalar_lea.sflag [#allocation10], %s344
        %s346 = sand.u32 %s79, 1
        %s347 = smul.addr %s346, 64
        %s348 = scalar_lea.vmem [#allocation11], %s347
        %p349 = pneg %p92
        %p350 = pneg %p88
        %p351 = scmp.lt.s32.totalorder %s30, 2
        %s352 = scalar_select %p351, %s30, 2
        %s353 = scalar_lea.vmem %s4, %s352
        %p354 = pneg %p111
        %p355 = pneg %p107
        %s356 = sand.u32 %s117, 1
        %s357 = scalar_lea.sflag [#allocation13], %s356
        %s358 = sand.u32 %s117, 1
        %s359 = smul.addr %s358, 64
        %s360 = scalar_lea.vmem [#allocation12], %s359
        %p361 = pneg %p130
        %p362 = pneg %p126
        %p363 = scmp.lt.s32.totalorder %s30, 2
        %s364 = scalar_select %p363, %s30, 2
        %s365 = scalar_lea.vmem %s6, %s364
        %p366 = pneg %p149
        %p367 = pneg %p145
        %p368 = scmp.lt.s32.totalorder %s30, 2
        %s369 = scalar_select %p368, %s30, 2
        %s370 = scalar_lea.vmem %s7, %s369
        %p371 = pneg %p168
        %p372 = pneg %p164
        %p373 = scmp.lt.s32.totalorder %s30, 2
        %s374 = scalar_select %p373, %s30, 2
        %s375 = scalar_lea.vmem %s8, %s374
        %p376 = pneg %p187
        %p377 = pneg %p183
        %s378 = smul.u32 4, %s31
        %p379 = scmp.lt.s32.totalorder %s30, 2
        %s380 = scalar_select %p379, %s30, 2
        %s381 = scalar_lea.vmem %s4, %s380
        %p382 = scmp.lt.s32.totalorder %s30, 2
        %s383 = scalar_select %p382, %s30, 2
        %s384 = scalar_lea.vmem %s6, %s383
        %p385 = scmp.lt.s32.totalorder %s30, 2
        %s386 = scalar_select %p385, %s30, 2
        %s387 = scalar_lea.vmem %s7, %s386
        %p388 = scmp.lt.s32.totalorder %s30, 2
        %s389 = scalar_select %p388, %s30, 2
        %s390 = scalar_lea.vmem %s8, %s389
        %p392 = scmp.eq.s32.totalorder %s30, 0
        %p393 = scmp.eq.s32.totalorder %s31, 0
        %p394 = pnand %p392, %p393
        %p395 = pneg %p394
        // Predicated region
        $region69: #{tpu_custom_call.1} parent=51 // pred_check
          _
        $region70: #{tpu_custom_call.1} parent=51 // pred_check_branch
          %397 = sbr.rel (%p394) target = $region72
        $region71: #{tpu_custom_call.1} parent=51 // pred_region
          // Predicated region
          $region73: #{tpu_custom_call.1} parent=71 // pred_check
            _
          $region74: #{tpu_custom_call.1} parent=71 // pred_check_branch
            %399 = sbr.rel target = $region76
          $region75: #{tpu_custom_call.1} parent=71 // pred_region
            %400 = sst [smem:[#allocation16]] [#allocation15]
            %401 = sst [smem:[#allocation17]] [#allocation14]
          $region76: #{tpu_custom_call.1} parent=71 // pred_fallthru
            _
          %403 = shalt.err (0)
          %s405 = sshll.u32 [#allocation2], 4
          %s406 = int_to_ptr.vmem [resolvable:$true] %s405
          %408 = dma.hbm_to_vmem [thread:$0]  %s0, 512, %s406, [#allocation6]
          %s409 = smul.u32 4, 8
          %s410 = smul.u32 %s409, 1
          %s411 = sshll.u32 %s410, 4
          %412 = dma.done [#allocation6], %s411
        $region72: #{tpu_custom_call.1} parent=51 // pred_fallthru
          _
        // Predicated region
        $region77: #{tpu_custom_call.1} parent=51 // pred_check
          %p413 = pneg %p393
        $region78: #{tpu_custom_call.1} parent=51 // pred_check_branch
          %415 = sbr.rel (%p413) target = $region80
        $region79: #{tpu_custom_call.1} parent=51 // pred_region
          %416 = vst [vmem:[#allocation4] sm:$0x1] 0.0
          %417 = vst [vmem:[#allocation5] sm:$0x1] 0.0
        $region80: #{tpu_custom_call.1} parent=51 // pred_fallthru
          _
        %s418 = smul.u32 %s31, 32
        %s419 = sshra.s32 %s418, 3
        %s420 = sand.u32 %s418, 7
        %s421 = smul.addr %s419, 4
        %s422 = scalar_lea.vmem [#allocation7], %s421
        %v423 = vld [vmem:[%s422] sm:$0xf]
        %v424 = vld [vmem:[%s422 + $0x4] sm:$0xf]
        %v425 = vld [vmem:[%s422 + $0x8] sm:$0xf]
        %v426 = vld [vmem:[%s422 + $0xc] sm:$0xf]
        %v427 = vld [vmem:[#allocation2] sm:$0xff]
        %v428 = vld [vmem:[#allocation2 + $0x8] sm:$0xff]
        %v429 = vld [vmem:[#allocation2 + $0x10] sm:$0xff]
        %v430 = vld [vmem:[#allocation2 + $0x18] sm:$0xff]
        %v431 = vld [vmem:[%s312] sm:$0xff]
        %v432 = vld [vmem:[%s312 + $0x8] sm:$0xff]
        %v433 = vld [vmem:[%s312 + $0x10] sm:$0xff]
        %v434 = vld [vmem:[%s312 + $0x18] sm:$0xff]
        %v439 = vunpack.c.l.b16 %v423
        %v440 = vunpack.c.l.b16 %v424
        %v441 = vunpack.c.l.b16 %v425
        %v442 = vunpack.c.l.b16 %v426
        %v443 = vpack.c.b16 %v440, %v439
        %v444 = vpack.c.b16 %v442, %v441
        %vm445 = vcmask 523264
        %v447 = vsel %vm445, %v443, 0
        %v450 = vsel %vm445, %v444, 0
        %452 = vmatprep.subr.bf16.mxu0 0
        %453 = vmatpush1.bf16.msra.mxu0 %v427
        %454 = vmatprep.subr.bf16.mxu0 0
        %455 = vmatpush1.bf16.msra.mxu0 %v428
        %456 = vmatprep.subr.bf16.mxu0 0
        %457 = vmatpush1.bf16.msra.mxu0 %v429
        %458 = vmatprep.subr.bf16.mxu0 0
        %459 = vmatpush1.bf16.msra.mxu0 %v430
        %460 = vmatprep.subr.bf16.mxu0 0
        %461 = vmatpush1.bf16.msra.mxu0 0
        %462 = vmatprep.subr.bf16.mxu0 0
        %463 = vmatpush1.bf16.msra.mxu0 0
        %464 = vmatprep.subr.bf16.mxu0 0
        %465 = vmatpush1.bf16.msra.mxu0 0
        %466 = vmatprep.subr.bf16.mxu0 0
        %467 = vmatpush1.bf16.msra.mxu0 0
        %468 = vmatprep.subr.bf16.mxu0 0
        %469 = vmatpush1.bf16.msra.mxu0 0
        %470 = vmatprep.subr.bf16.mxu0 0
        %471 = vmatpush1.bf16.msra.mxu0 0
        %472 = vmatprep.subr.bf16.mxu0 0
        %473 = vmatpush1.bf16.msra.mxu0 0
        %474 = vmatprep.subr.bf16.mxu0 0
        %475 = vmatpush1.bf16.msra.mxu0 0
        %476 = vmatprep.subr.bf16.mxu0 0
        %477 = vmatpush1.bf16.msra.mxu0 0
        %478 = vmatprep.subr.bf16.mxu0 0
        %479 = vmatpush1.bf16.msra.mxu0 0
        %480 = vmatprep.subr.bf16.mxu0 0
        %481 = vmatpush1.bf16.msra.mxu0 0
        %482 = vmatprep.subr.bf16.mxu0 0
        %483 = vmatpush1.bf16.msra.mxu0 0
        %484 = vmatprep.mubr.bf16.mxu0 0
        %485 = vmatmul.mubr.bf16.gmra.mrb[0].mxu0 %v447
        %v486 = vpop.f32.mrb[0].mxu0
        %v487 = vadd.f32 %v431, %v486
        %v488 = vpop.f32.mrb[0].mxu0
        %v489 = vpop.f32.mrb[0].mxu0
        %v490 = vadd.f32 %v432, %v489
        %v491 = vpop.f32.mrb[0].mxu0
        %492 = vmatprep.mubr.bf16.mxu0 0
        %493 = vmatmul.mubr.bf16.gmra.mrb[0].mxu0 %v450
        %v494 = vpop.f32.mrb[0].mxu0
        %v495 = vadd.f32 %v433, %v494
        %v496 = vpop.f32.mrb[0].mxu0
        %v497 = vpop.f32.mrb[0].mxu0
        %v498 = vadd.f32 %v434, %v497
        %v499 = vpop.f32.mrb[0].mxu0
        %500 = vdwg.mxu0
        %v501 = vpack.c.bf16 %v490, %v487
        %v502 = vpack.c.bf16 %v498, %v495
        %v503 = vld [vmem:[%s321] sm:$0xf]
        %v504 = vld [vmem:[%s321 + $0x4] sm:$0xf]
        %v505 = vld [vmem:[%s321 + $0x8] sm:$0xf]
        %v506 = vld [vmem:[%s321 + $0xc] sm:$0xf]
        %v507 = vld [vmem:[%s321 + $0x10] sm:$0xf]
        %v508 = vld [vmem:[%s321 + $0x14] sm:$0xf]
        %v509 = vld [vmem:[%s321 + $0x18] sm:$0xf]
        %v510 = vld [vmem:[%s321 + $0x1c] sm:$0xf]
        %v511 = vld [vmem:[%s321 + $0x20] sm:$0xf]
        %v512 = vld [vmem:[%s321 + $0x24] sm:$0xf]
        %v513 = vld [vmem:[%s321 + $0x28] sm:$0xf]
        %v514 = vld [vmem:[%s321 + $0x2c] sm:$0xf]
        %v515 = vld [vmem:[%s321 + $0x30] sm:$0xf]
        %v516 = vld [vmem:[%s321 + $0x34] sm:$0xf]
        %v517 = vld [vmem:[%s321 + $0x38] sm:$0xf]
        %v518 = vld [vmem:[%s321 + $0x3c] sm:$0xf]
        %v519 = vld [vmem:[%s381] sm:$0x1]
        %v521 = vlaneseq
        %v522 = vshrl.u32 %v521, 7
        %v523 = vsub.s32 0, %v522
        %v524 = vrot.slane %v519, %v523
        %v542 = vunpack.c.l.b16 %v503
        %v543 = vunpack.c.l.b16 %v504
        %v544 = vunpack.c.l.b16 %v505
        %v545 = vunpack.c.l.b16 %v506
        %v546 = vunpack.c.l.b16 %v507
        %v547 = vunpack.c.l.b16 %v508
        %v548 = vunpack.c.l.b16 %v509
        %v549 = vunpack.c.l.b16 %v510
        %v550 = vunpack.c.l.b16 %v511
        %v551 = vunpack.c.l.b16 %v512
        %v552 = vunpack.c.l.b16 %v513
        %v553 = vunpack.c.l.b16 %v514
        %v554 = vunpack.c.l.b16 %v515
        %v555 = vunpack.c.l.b16 %v516
        %v556 = vunpack.c.l.b16 %v517
        %v557 = vunpack.c.l.b16 %v518
        %v558 = vpack.c.b16 %v543, %v542
        %v559 = vpack.c.b16 %v545, %v544
        %v560 = vpack.c.b16 %v547, %v546
        %v561 = vpack.c.b16 %v549, %v548
        %v562 = vpack.c.b16 %v551, %v550
        %v563 = vpack.c.b16 %v553, %v552
        %v564 = vpack.c.b16 %v555, %v554
        %v565 = vpack.c.b16 %v557, %v556
        %574 = vmatprep.subr.bf16.mxu0 0
        %575 = vmatpush1.bf16.msra.mxu0 %v558
        %576 = vmatprep.subr.bf16.mxu0 0
        %577 = vmatpush1.bf16.msra.mxu0 %v559
        %578 = vmatprep.subr.bf16.mxu0 0
        %579 = vmatpush1.bf16.msra.mxu0 %v560
        %580 = vmatprep.subr.bf16.mxu0 0
        %581 = vmatpush1.bf16.msra.mxu0 %v561
        %582 = vmatprep.subr.bf16.mxu0 0
        %583 = vmatpush1.bf16.msra.mxu0 %v562
        %584 = vmatprep.subr.bf16.mxu0 0
        %585 = vmatpush1.bf16.msra.mxu0 %v563
        %586 = vmatprep.subr.bf16.mxu0 0
        %587 = vmatpush1.bf16.msra.mxu0 %v564
        %588 = vmatprep.subr.bf16.mxu0 0
        %589 = vmatpush1.bf16.msra.mxu0 %v565
        %590 = vmatprep.subr.bf16.mxu0 0
        %591 = vmatpush1.bf16.msra.mxu0 0
        %592 = vmatprep.subr.bf16.mxu0 0
        %593 = vmatpush1.bf16.msra.mxu0 0
        %594 = vmatprep.subr.bf16.mxu0 0
        %595 = vmatpush1.bf16.msra.mxu0 0
        %596 = vmatprep.subr.bf16.mxu0 0
        %597 = vmatpush1.bf16.msra.mxu0 0
        %598 = vmatprep.subr.bf16.mxu0 0
        %599 = vmatpush1.bf16.msra.mxu0 0
        %600 = vmatprep.subr.bf16.mxu0 0
        %601 = vmatpush1.bf16.msra.mxu0 0
        %602 = vmatprep.subr.bf16.mxu0 0
        %603 = vmatpush1.bf16.msra.mxu0 0
        %604 = vmatprep.subr.bf16.mxu0 0
        %605 = vmatpush1.bf16.msra.mxu0 0
        %606 = vmatprep.mubr.bf16.mxu0 0
        %607 = vmatmul.mubr.bf16.gmra.mrb[0].mxu0 %v501
        %v608 = vpop.f32.mrb[0].mxu0
        %v609 = vadd.f32 %v524, %v608
        %v610 = vpop.f32.mrb[0].mxu0
        %v611 = vpop.f32.mrb[0].mxu0
        %v612 = vadd.f32 %v524, %v611
        %v613 = vpop.f32.mrb[0].mxu0
        %614 = vmatprep.mubr.bf16.mxu0 0
        %615 = vmatmul.mubr.bf16.gmra.mrb[0].mxu0 %v502
        %v616 = vpop.f32.mrb[0].mxu0
        %v617 = vadd.f32 %v524, %v616
        %v618 = vpop.f32.mrb[0].mxu0
        %v619 = vpop.f32.mrb[0].mxu0
        %v620 = vadd.f32 %v524, %v619
        %v621 = vpop.f32.mrb[0].mxu0
        %622 = vdwg.mxu0
        %v623 = vmax.f32 %v609, 0.0
        %v624 = vmax.f32 %v612, 0.0
        %v625 = vmax.f32 %v617, 0.0
        %v626 = vmax.f32 %v620, 0.0
        %v627 = vpack.c.bf16 %v624, %v623
        %v628 = vpack.c.bf16 %v626, %v625
        %v629 = vld [vmem:[%s330] sm:$0xf]
        %v630 = vld [vmem:[%s330 + $0x4] sm:$0xf]
        %v631 = vld [vmem:[%s330 + $0x8] sm:$0xf]
        %v632 = vld [vmem:[%s330 + $0xc] sm:$0xf]
        %v633 = vld [vmem:[%s330 + $0x10] sm:$0xf]
        %v634 = vld [vmem:[%s330 + $0x14] sm:$0xf]
        %v635 = vld [vmem:[%s330 + $0x18] sm:$0xf]
        %v636 = vld [vmem:[%s330 + $0x1c] sm:$0xf]
        %v637 = vld [vmem:[%s330 + $0x20] sm:$0xf]
        %v638 = vld [vmem:[%s330 + $0x24] sm:$0xf]
        %v639 = vld [vmem:[%s330 + $0x28] sm:$0xf]
        %v640 = vld [vmem:[%s330 + $0x2c] sm:$0xf]
        %v641 = vld [vmem:[%s330 + $0x30] sm:$0xf]
        %v642 = vld [vmem:[%s330 + $0x34] sm:$0xf]
        %v643 = vld [vmem:[%s330 + $0x38] sm:$0xf]
        %v644 = vld [vmem:[%s330 + $0x3c] sm:$0xf]
        %v645 = vld [vmem:[%s384] sm:$0x1]
        %v647 = vlaneseq
        %v648 = vshrl.u32 %v647, 7
        %v649 = vsub.s32 0, %v648
        %v650 = vrot.slane %v645, %v649
        %v668 = vunpack.c.l.b16 %v629
        %v669 = vunpack.c.l.b16 %v630
        %v670 = vunpack.c.l.b16 %v631
        %v671 = vunpack.c.l.b16 %v632
        %v672 = vunpack.c.l.b16 %v633
        %v673 = vunpack.c.l.b16 %v634
        %v674 = vunpack.c.l.b16 %v635
        %v675 = vunpack.c.l.b16 %v636
        %v676 = vunpack.c.l.b16 %v637
        %v677 = vunpack.c.l.b16 %v638
        %v678 = vunpack.c.l.b16 %v639
        %v679 = vunpack.c.l.b16 %v640
        %v680 = vunpack.c.l.b16 %v641
        %v681 = vunpack.c.l.b16 %v642
        %v682 = vunpack.c.l.b16 %v643
        %v683 = vunpack.c.l.b16 %v644
        %v684 = vpack.c.b16 %v669, %v668
        %v685 = vpack.c.b16 %v671, %v670
        %v686 = vpack.c.b16 %v673, %v672
        %v687 = vpack.c.b16 %v675, %v674
        %v688 = vpack.c.b16 %v677, %v676
        %v689 = vpack.c.b16 %v679, %v678
        %v690 = vpack.c.b16 %v681, %v680
        %v691 = vpack.c.b16 %v683, %v682
        %700 = vmatprep.subr.bf16.mxu0 0
        %701 = vmatpush1.bf16.msra.mxu0 %v684
        %702 = vmatprep.subr.bf16.mxu0 0
        %703 = vmatpush1.bf16.msra.mxu0 %v685
        %704 = vmatprep.subr.bf16.mxu0 0
        %705 = vmatpush1.bf16.msra.mxu0 %v686
        %706 = vmatprep.subr.bf16.mxu0 0
        %707 = vmatpush1.bf16.msra.mxu0 %v687
        %708 = vmatprep.subr.bf16.mxu0 0
        %709 = vmatpush1.bf16.msra.mxu0 %v688
        %710 = vmatprep.subr.bf16.mxu0 0
        %711 = vmatpush1.bf16.msra.mxu0 %v689
        %712 = vmatprep.subr.bf16.mxu0 0
        %713 = vmatpush1.bf16.msra.mxu0 %v690
        %714 = vmatprep.subr.bf16.mxu0 0
        %715 = vmatpush1.bf16.msra.mxu0 %v691
        %716 = vmatprep.subr.bf16.mxu0 0
        %717 = vmatpush1.bf16.msra.mxu0 0
        %718 = vmatprep.subr.bf16.mxu0 0
        %719 = vmatpush1.bf16.msra.mxu0 0
        %720 = vmatprep.subr.bf16.mxu0 0
        %721 = vmatpush1.bf16.msra.mxu0 0
        %722 = vmatprep.subr.bf16.mxu0 0
        %723 = vmatpush1.bf16.msra.mxu0 0
        %724 = vmatprep.subr.bf16.mxu0 0
        %725 = vmatpush1.bf16.msra.mxu0 0
        %726 = vmatprep.subr.bf16.mxu0 0
        %727 = vmatpush1.bf16.msra.mxu0 0
        %728 = vmatprep.subr.bf16.mxu0 0
        %729 = vmatpush1.bf16.msra.mxu0 0
        %730 = vmatprep.subr.bf16.mxu0 0
        %731 = vmatpush1.bf16.msra.mxu0 0
        %732 = vmatprep.mubr.bf16.mxu0 0
        %733 = vmatmul.mubr.bf16.gmra.mrb[0].mxu0 %v627
        %v734 = vpop.f32.mrb[0].mxu0
        %v735 = vadd.f32 %v650, %v734
        %v736 = vpop.f32.mrb[0].mxu0
        %v737 = vpop.f32.mrb[0].mxu0
        %v738 = vadd.f32 %v650, %v737
        %v739 = vpop.f32.mrb[0].mxu0
        %740 = vmatprep.mubr.bf16.mxu0 0
        %741 = vmatmul.mubr.bf16.gmra.mrb[0].mxu0 %v628
        %v742 = vpop.f32.mrb[0].mxu0
        %v743 = vadd.f32 %v650, %v742
        %v744 = vpop.f32.mrb[0].mxu0
        %v745 = vpop.f32.mrb[0].mxu0
        %v746 = vadd.f32 %v650, %v745
        %v747 = vpop.f32.mrb[0].mxu0
        %748 = vdwg.mxu0
        %s749 = scalar_lea.vmem [#allocation3], %s418
        %750 = vst [vmem:[%s749] sm:$0xff] %v735
        %751 = vst [vmem:[%s749 + $0x8] sm:$0xff] %v738
        %752 = vst [vmem:[%s749 + $0x10] sm:$0xff] %v743
        %753 = vst [vmem:[%s749 + $0x18] sm:$0xff] %v746
        %p754 = scmp.lt.s32.totalorder %s31, 1
        // Predicated region
        $region81: #{tpu_custom_call.1} parent=51 // pred_check
          %p755 = pneg %p754
        $region82: #{tpu_custom_call.1} parent=51 // pred_check_branch
          %757 = sbr.rel (%p755) target = $region84
        $region83: #{tpu_custom_call.1} parent=51 // pred_region
          %v758 = vld [vmem:[#allocation4] sm:$0x1]
          %v759 = vadd.f32 %v735, %v738
          %v760 = vadd.f32 %v759, %v743
          %v761 = vadd.f32 %v760, %v746
          %v762 = vrot.slane %v761, 4
          %v763 = vadd.f32 %v761, %v762
          %v764 = vrot.slane %v763, 2
          %v765 = vadd.f32 %v763, %v764
          %v766 = vrot.slane %v765, 1
          %v767 = vadd.f32 %v765, %v766
          %v768 = vadd.f32 %v758, %v767
          %769 = vst [vmem:[#allocation4] sm:$0x1] %v768
          %v770 = vld [vmem:[#allocation5] sm:$0x1]
          %v771 = vmul.f32 %v735, %v735
          %v772 = vmul.f32 %v738, %v738
          %v773 = vmul.f32 %v743, %v743
          %v774 = vmul.f32 %v746, %v746
          %v775 = vadd.f32 %v771, %v772
          %v776 = vadd.f32 %v775, %v773
          %v777 = vadd.f32 %v776, %v774
          %v778 = vrot.slane %v777, 4
          %v779 = vadd.f32 %v777, %v778
          %v780 = vrot.slane %v779, 2
          %v781 = vadd.f32 %v779, %v780
          %v782 = vrot.slane %v781, 1
          %v783 = vadd.f32 %v781, %v782
          %v784 = vadd.f32 %v770, %v783
          %785 = vst [vmem:[#allocation5] sm:$0x1] %v784
        $region84: #{tpu_custom_call.1} parent=51 // pred_fallthru
          _
        %p786 = scmp.eq.s32.totalorder %s31, 1
        // Predicated region
        $region85: #{tpu_custom_call.1} parent=51 // pred_check
          %p787 = pneg %p786
        $region86: #{tpu_custom_call.1} parent=51 // pred_check_branch
          %789 = sbr.rel (%p787) target = $region88
        $region87: #{tpu_custom_call.1} parent=51 // pred_region
          %v790 = vlaneseq
          %v791 = vshrl.u32 %v790, 7
          %v792 = vadd.s32 %v791, 8
          %v793 = vadd.s32 %v791, 16
          %v794 = vadd.s32 %v791, 24
          %v795 = vstv %s418
          %v796 = vadd.s32 %v795, %v791
          %v797 = vadd.s32 %v795, %v792
          %v798 = vadd.s32 %v795, %v793
          %v799 = vadd.s32 %v795, %v794
          %vm800 = vcmp.lt.s32.totalorder %v796, 44
          %vm801 = vcmp.lt.s32.totalorder %v797, 44
          %vm802 = vcmp.lt.s32.totalorder %v798, 44
          %vm803 = vcmp.lt.s32.totalorder %v799, 44
          %v804 = vsel %vm800, 1, 0
          %v805 = vsel %vm801, 1, 0
          %v806 = vsel %vm802, 1, 0
          %v807 = vsel %vm803, 1, 0
          %v808 = vcvt.s32.f32 %v804
          %v809 = vcvt.s32.f32 %v805
          %v810 = vcvt.s32.f32 %v806
          %v811 = vcvt.s32.f32 %v807
          %v812 = vmul.f32 %v735, %v808
          %v813 = vmul.f32 %v738, %v809
          %v814 = vmul.f32 %v743, %v810
          %v815 = vmul.f32 %v746, %v811
          %v816 = vld [vmem:[#allocation4] sm:$0x1]
          %v817 = vadd.f32 %v812, %v813
          %v818 = vadd.f32 %v817, %v814
          %v819 = vadd.f32 %v818, %v815
          %v820 = vrot.slane %v819, 4
          %v821 = vadd.f32 %v819, %v820
          %v822 = vrot.slane %v821, 2
          %v823 = vadd.f32 %v821, %v822
          %v824 = vrot.slane %v823, 1
          %v825 = vadd.f32 %v823, %v824
          %v826 = vadd.f32 %v816, %v825
          %827 = vst [vmem:[#allocation4] sm:$0x1] %v826
          %v828 = vld [vmem:[#allocation5] sm:$0x1]
          %v829 = vmul.f32 %v812, %v735
          %v830 = vmul.f32 %v813, %v738
          %v831 = vmul.f32 %v814, %v743
          %v832 = vmul.f32 %v815, %v746
          %v833 = vadd.f32 %v829, %v830
          %v834 = vadd.f32 %v833, %v831
          %v835 = vadd.f32 %v834, %v832
          %v836 = vrot.slane %v835, 4
          %v837 = vadd.f32 %v835, %v836
          %v838 = vrot.slane %v837, 2
          %v839 = vadd.f32 %v837, %v838
          %v840 = vrot.slane %v839, 1
          %v841 = vadd.f32 %v839, %v840
          %v842 = vadd.f32 %v828, %v841
          %843 = vst [vmem:[#allocation5] sm:$0x1] %v842
          %v844 = vld [vmem:[#allocation4] sm:$0x1]
          %v845 = vmul.f32 %v844, 0.022727273
          %v846 = vld [vmem:[#allocation5] sm:$0x1]
          %v847 = vmul.f32 %v846, 0.022727273
          %v848 = vmul.f32 %v845, %v845
          %v849 = vsub.f32 %v847, %v848
          %v850 = vld [vmem:[%s387] sm:$0x1]
          %v851 = vadd.f32 %v849, 1e-05
          %v852 = vrsqrt.pop %v851
          %v853 = vmul.f32 %v850, %v852
          %v854 = vld [vmem:[%s390] sm:$0x1]
          %v855 = vmul.f32 %v845, %v853
          %v856 = vsub.f32 %v854, %v855
          %v857 = vld [vmem:[#allocation3] sm:$0xff]
          %v858 = vld [vmem:[#allocation3 + $0x8] sm:$0xff]
          %v859 = vld [vmem:[#allocation3 + $0x10] sm:$0xff]
          %v860 = vld [vmem:[#allocation3 + $0x18] sm:$0xff]
          %v861 = vld [vmem:[#allocation3 + $0x20] sm:$0xff]
          %v862 = vld [vmem:[#allocation3 + $0x28] sm:$0xff]
          %v863 = vld [vmem:[#allocation3 + $0x30] sm:$0xff]
          %v864 = vld [vmem:[#allocation3 + $0x38] sm:$0xff]
          %v866 = vlaneseq
          %v867 = vshrl.u32 %v866, 7
          %v868 = vsub.s32 0, %v867
          %v869 = vrot.slane %v853, %v868
          %v871 = vmul.f32 %v857, %v869
          %v872 = vmul.f32 %v858, %v869
          %v873 = vmul.f32 %v859, %v869
          %v874 = vmul.f32 %v860, %v869
          %v875 = vmul.f32 %v861, %v869
          %v876 = vmul.f32 %v862, %v869
          %v877 = vmul.f32 %v863, %v869
          %v878 = vmul.f32 %v864, %v869
          %v880 = vlaneseq
          %v881 = vshrl.u32 %v880, 7
          %v882 = vsub.s32 0, %v881
          %v883 = vrot.slane %v856, %v882
          %v885 = vadd.f32 %v871, %v883
          %v886 = vadd.f32 %v872, %v883
          %v887 = vadd.f32 %v873, %v883
          %v888 = vadd.f32 %v874, %v883
          %v889 = vadd.f32 %v875, %v883
          %v890 = vadd.f32 %v876, %v883
          %v891 = vadd.f32 %v877, %v883
          %v892 = vadd.f32 %v878, %v883
          %p893 = scmp.lt.s32.totalorder %s30, 2
          // Predicated region
          $region89: #{tpu_custom_call.1} parent=87 // pred_check
            %p894 = pneg %p893
          $region90: #{tpu_custom_call.1} parent=87 // pred_check_branch
            %896 = sbr.rel (%p894) target = $region92
          $region91: #{tpu_custom_call.1} parent=87 // pred_region
            %v897 = vmax.f32 %v885, 0.0
            %v898 = vmax.f32 %v886, 0.0
            %v899 = vmax.f32 %v887, 0.0
            %v900 = vmax.f32 %v888, 0.0
            %v901 = vmax.f32 %v889, 0.0
            %v902 = vmax.f32 %v890, 0.0
            %v903 = vmax.f32 %v891, 0.0
            %v904 = vmax.f32 %v892, 0.0
            %v905 = vpack.c.bf16 %v898, %v897
            %v906 = vpack.c.bf16 %v900, %v899
            %v907 = vpack.c.bf16 %v902, %v901
            %v908 = vpack.c.bf16 %v904, %v903
            %909 = vst [vmem:[#allocation2] sm:$0xff] %v905
            %910 = vst [vmem:[#allocation2 + $0x8] sm:$0xff] %v906
            %911 = vst [vmem:[#allocation2 + $0x10] sm:$0xff] %v907
            %912 = vst [vmem:[#allocation2 + $0x18] sm:$0xff] %v908
          $region92: #{tpu_custom_call.1} parent=87 // pred_fallthru
            _
          %p913 = scmp.eq.s32.totalorder %s30, 2
          // Predicated region
          $region93: #{tpu_custom_call.1} parent=87 // pred_check
            %p914 = pneg %p913
          $region94: #{tpu_custom_call.1} parent=87 // pred_check_branch
            %916 = sbr.rel (%p914) target = $region96
          $region95: #{tpu_custom_call.1} parent=87 // pred_region
            %917 = vst [vmem:[#allocation3] sm:$0xff] %v885
            %918 = vst [vmem:[#allocation3 + $0x8] sm:$0xff] %v886
            %919 = vst [vmem:[#allocation3 + $0x10] sm:$0xff] %v887
            %920 = vst [vmem:[#allocation3 + $0x18] sm:$0xff] %v888
            %921 = vst [vmem:[#allocation3 + $0x20] sm:$0xff] %v889
            %922 = vst [vmem:[#allocation3 + $0x28] sm:$0xff] %v890
            %923 = vst [vmem:[#allocation3 + $0x30] sm:$0xff] %v891
            %924 = vst [vmem:[#allocation3 + $0x38] sm:$0xff] %v892
            // Predicated region
            $region97: #{tpu_custom_call.1} parent=95 // pred_check
              _
            $region98: #{tpu_custom_call.1} parent=95 // pred_check_branch
              %926 = sbr.rel target = $region100
            $region99: #{tpu_custom_call.1} parent=95 // pred_region
              %927 = sst [smem:[#allocation16]] [#allocation19]
              %928 = sst [smem:[#allocation17]] [#allocation18]
            $region100: #{tpu_custom_call.1} parent=95 // pred_fallthru
              _
            %930 = shalt.err (0)
            %s932 = sshll.u32 [#allocation3], 4
            %s933 = int_to_ptr.vmem [resolvable:$true] %s932
            %935 = dma.vmem_to_hbm [thread:$0]  %s933, 1024, %s9, [#allocation6]
            %s936 = smul.u32 64, 1
            %s937 = sshll.u32 %s936, 4
            %938 = dma.done [#allocation6], %s937
          $region96: #{tpu_custom_call.1} parent=87 // pred_fallthru
            _
        $region88: #{tpu_custom_call.1} parent=51 // pred_fallthru
          _
      $region52: #{tpu_custom_call.1} parent=5 // pred_fallthru
        _
    $region6: #{tpu_custom_call.1} parent=1 // loop_footer
      %s26 = sadd.s32 1, %s22
    $region7: #{tpu_custom_call.1} parent=1 // loop_footer_branch
      %21 = sbr.rel target = $region3
    $region8: #{tpu_custom_call.1} parent=1 // loop_exit
      _
    %939 = vsyncpa [#allocation8], 1
    %s940 = scalar_lea.sflag [#allocation8], 1
    %941 = vsyncpa %s940, 1
    %942 = vsyncpa [#allocation10], 1
    %s943 = scalar_lea.sflag [#allocation10], 1
    %944 = vsyncpa %s943, 1
    %945 = vsyncpa [#allocation13], 1
    %s946 = scalar_lea.sflag [#allocation13], 1
    %947 = vsyncpa %s946, 1
  %948 = vsyncmov [#allocation6]
  %s949 = vpop.sfrf %948
  %p950 = scmp.eq.s32.totalorder %s949, 0
  %p951 = pneg %p950
  %953 = shalt.err (%p951)

</llo_original>
